<compile_context>
chip_gen: v6e
topology: v6e:2x2x1
jax: 0.10.0
libtpu: 0.0.40
codegen_flags: <defaults>
</compile_context>

<pallas_src>
import functools

import jax
import jax.numpy as jnp
from jax import lax
from jax.experimental import pallas as pl
from jax.experimental.pallas import tpu as pltpu

_C1 = 0.01 ** 2
_C2 = 0.03 ** 2


# ------------------------------ in-kernel helpers ---------------------------

def _ssim_sum_from_moments(mu_x, mu_y, e_xx, e_yy, e_xy):
    """Sum of the SSIM-loss map given the five 3x3-reflect-pooled moments."""
    mu_x2 = mu_x * mu_x
    mu_y2 = mu_y * mu_y
    mu_xy = mu_x * mu_y
    sigma_x = e_xx - mu_x2
    sigma_y = e_yy - mu_y2
    sigma_xy = e_xy - mu_xy
    ssim_n = (2.0 * mu_xy + _C1) * (2.0 * sigma_xy + _C2)
    ssim_d = (mu_x2 + mu_y2 + _C1) * (sigma_x + sigma_y + _C2)
    # EUP vrcp (otherwise-idle slot) + one Newton step -> ~f32-exact reciprocal
    # without burning the saturated VALU slots; ssim_d >= C1*C2 > 0.
    r = pl.reciprocal(ssim_d, approx=True)
    inv_d = r * (2.0 - ssim_d * r)
    ssim_map = jnp.clip((1.0 - ssim_n * inv_d) * 0.5, 0.0, 1.0)
    return jnp.sum(ssim_map)


def _write_partials(out_ref, mse_sum, ssim_sum):
    # Lane-dense (2, 128) block replicated across lanes -> plain unmasked vst.
    row = lax.broadcasted_iota(jnp.int32, (2, 128), 0)
    out_ref[...] = jnp.where(row == 0, mse_sum, ssim_sum).astype(jnp.float32)


def _mse_ssim_mxu_kernel(pw_ref, ph_ref, x_ref, y_ref, out_ref):
    """MSE + SSIM partial sums for one (P*H, W) slab of packed planes (MXU path).

    pw_ref: (W, W) lane-pass reflect-pool matrix (right-multiply), 1/3 folded in.
    ph_ref: (P*H, P*H) block-diagonal sublane-pass matrix (left-multiply), 1/3
            folded in, so Ph @ (X @ Pw) == ReflectionPad2d(1) + AvgPool2d(3, 1).
    Both matrices stay VMEM-resident (index_map always returns (0, 0)).
    """
    x = x_ref[...].astype(jnp.float32)
    y = y_ref[...].astype(jnp.float32)

    diff = x - y
    mse_sum = jnp.sum(diff * diff)

    pw = pw_ref[...]
    ph = ph_ref[...]

    def lane_pool(v):
        return jnp.dot(v, pw, preferred_element_type=jnp.float32)

    def sublane_pool(v):
        return jnp.dot(ph, v, preferred_element_type=jnp.float32)

    # Lane pass for all five moments first so x, y and the raw products are dead
    # before the sublane pass (caps peak live f32 temporaries / vreg pressure).
    sx, sy = lane_pool(x), lane_pool(y)
    sxx, syy, sxy = lane_pool(x * x), lane_pool(y * y), lane_pool(x * y)

    mu_x, mu_y = sublane_pool(sx), sublane_pool(sy)
    e_xx, e_yy, e_xy = sublane_pool(sxx), sublane_pool(syy), sublane_pool(sxy)

    ssim_sum = _ssim_sum_from_moments(mu_x, mu_y, e_xx, e_yy, e_xy)
    _write_partials(out_ref, mse_sum, ssim_sum)


def _mse_ssim_roll_kernel(x_ref, y_ref, out_ref, *, plane_h):
    """Fallback for large planes: separable reflect pool via XLU rolls + selects.

    A dense pool matrix for a 1920-wide plane would cost 14.7 MiB of VMEM and
    O(W) MACs per element, so the roll path stays cheaper there.
    """
    x = x_ref[...].astype(jnp.float32)
    y = y_ref[...].astype(jnp.float32)
    PH, W = x.shape

    diff = x - y
    mse_sum = jnp.sum(diff * diff)

    def sum3(v, axis, first, last, n):
        prev = pltpu.roll(v, 1, axis)        # v[i-1] (circular)
        nxt = pltpu.roll(v, n - 1, axis)     # v[i+1] (circular)
        left = jnp.where(first, nxt, prev)   # reflect: v[-1] -> v[1]
        right = jnp.where(last, prev, nxt)   # reflect: v[n]  -> v[n-2]
        return left + v + right

    # Lane pass first; the column masks and the raw products die before the
    # sublane pass starts (lower vreg pressure through the hottest region).
    col_idx = lax.broadcasted_iota(jnp.int32, (PH, W), 1)
    col_first = col_idx == 0
    col_last = col_idx == W - 1
    sum3_w = lambda v: sum3(v, 1, col_first, col_last, W)
    sx, sy = sum3_w(x), sum3_w(y)
    sxx, syy, sxy = sum3_w(x * x), sum3_w(y * y), sum3_w(x * y)

    # Sublane pass; row masks are modular in plane_h so planes packed along the
    # sublane axis reflect at their own boundaries (no cross-plane leakage).
    row_idx = lax.broadcasted_iota(jnp.int32, (PH, W), 0) % plane_h
    row_first = row_idx == 0
    row_last = row_idx == plane_h - 1
    sum3_h = lambda v: sum3(v, 0, row_first, row_last, PH)

    ninth = jnp.float32(1.0 / 9.0)
    mu_x, mu_y = sum3_h(sx) * ninth, sum3_h(sy) * ninth
    e_xx, e_yy, e_xy = sum3_h(sxx) * ninth, sum3_h(syy) * ninth, sum3_h(sxy) * ninth

    ssim_sum = _ssim_sum_from_moments(mu_x, mu_y, e_xx, e_yy, e_xy)
    _write_partials(out_ref, mse_sum, ssim_sum)


# ------------------------------ host-side helpers ---------------------------

def _reflect_pool_matrix(n, dtype=jnp.float32):
    """1-D factor of ReflectionPad(1) + AvgPool(3, stride=1); rows are outputs.

    Interior row i: [.., 1, 1, 1, ..]/3; row 0: [1, 2, 0, ..]/3; row n-1:
    [.., 0, 2, 1]/3 (reflection folded into the boundary rows).
    """
    i = jnp.arange(n)
    m = jnp.zeros((n, n), dtype)
    m = m.at[i, i].add(1.0)
    m = m.at[i[1:], i[1:] - 1].add(1.0)     # left neighbour, rows >= 1
    m = m.at[0, 1].add(1.0)                 # reflected left neighbour of row 0
    m = m.at[i[:-1], i[:-1] + 1].add(1.0)   # right neighbour, rows <= n-2
    m = m.at[n - 1, n - 2].add(1.0)         # reflected right neighbour of row n-1
    return m * (1.0 / 3.0)


def _choose_pack(n_planes, h, w):
    """Number of (H, W) planes stacked along sublanes per grid step.

    Targets: <= ~1 MiB of f32 working tile per input, <= 512 stacked sublanes
    (keeps the block-diagonal sublane pool matrix small), and >= 2 grid steps
    whenever possible so the 'parallel' axis can split across v7x's two cores.
    """
    best = 1
    for p in range(1, n_planes + 1):
        if n_planes % p:
            continue
        if p * h > 512 or p * h * w * 4 > (1 << 20):
            break
        if n_planes >= 2 and n_planes // p < 2:
            continue
        best = p
    return best


def _vmem_limit_bytes(ph, w, itemsize, mat_bytes):
    """Scoped-VMEM budget per grid step, with a generation-aware cap."""
    in_tile = ph * w * itemsize
    f32_plane = ph * w * 4
    # 2 inputs x 2 pipeline buffers; ~12 slab-sized live f32 values at the peak
    # (x, y, the 5 lane-pass moments, pooled results / roll temporaries / masks);
    # pool matrices are (double-buffered) inputs too; plus fixed slack.
    need = 2 * 2 * in_tile + 12 * f32_plane + 2 * 2 * mat_bytes + (2 << 20)
    try:
        # ~90 MiB on v5e/v6e (128 MiB VMEM), ~45 MiB on v7x (64 MiB VMEM).
        cap = int(0.70 * pltpu.get_tpu_info().vmem_capacity_bytes)
    except Exception:
        cap = 40 << 20
    return int(min(max(need, 16 << 20), cap))


def mse_ssim_pallas(x, y):
    """(mean MSE, mean SSIM-loss) of two NCHW batches via one gridded Pallas kernel."""
    assert x.shape == y.shape and x.ndim == 4
    B, C, H, W = x.shape
    assert H >= 2 and W >= 2, "ReflectionPad2d(1) requires H >= 2 and W >= 2"
    BC = B * C

    P = _choose_pack(BC, H, W)
    G = BC // P
    PH = P * H
    x3 = x.reshape(G, PH, W)          # contiguous: planes stacked along sublanes
    y3 = y.reshape(G, PH, W)
    itemsize = max(jnp.dtype(x.dtype).itemsize, jnp.dtype(y.dtype).itemsize)

    # MXU offload of the separable reflect pool for small/medium planes; also
    # avoids lane-axis rolls for non-128-multiple widths.  (v6e/v7x could raise
    # the W gate to ~512; 256 stays safe for v5e's smaller MXU.)
    use_mxu = (W <= 256) and (PH <= 512)

    slab_spec = pl.BlockSpec((None, PH, W), lambda i: (i, 0, 0))
    mat_bytes = 0
    extra_inputs = ()
    extra_specs = []
    if use_mxu:
        pw = _reflect_pool_matrix(W).T                          # lane pass: S @ pw
        ph1 = _reflect_pool_matrix(H)
        ph_full = jnp.kron(jnp.eye(P, dtype=ph1.dtype), ph1)    # block-diag sublane pass
        mat_bytes = (W * W + PH * PH) * 4
        kernel = _mse_ssim_mxu_kernel
        extra_inputs = (pw, ph_full)
        extra_specs = [pl.BlockSpec((W, W), lambda i: (0, 0)),   # VMEM-resident
                       pl.BlockSpec((PH, PH), lambda i: (0, 0))]
    else:
        kernel = functools.partial(_mse_ssim_roll_kernel, plane_h=H)

    partials = pl.pallas_call(
        kernel,
        out_shape=jax.ShapeDtypeStruct((G, 2, 128), jnp.float32),
        grid_spec=pltpu.PrefetchScalarGridSpec(
            num_scalar_prefetch=0,
            grid=(G,),
            in_specs=extra_specs + [slab_spec, slab_spec],
            out_specs=pl.BlockSpec((None, 2, 128), lambda i: (i, 0, 0)),
        ),
        compiler_params=pltpu.CompilerParams(
            dimension_semantics=("parallel",),
            vmem_limit_bytes=_vmem_limit_bytes(PH, W, itemsize, mat_bytes),
        ),
    )(*extra_inputs, x3, y3)

    sums = jnp.sum(partials[:, :, 0], axis=0)       # (2,) = [sum dsq, sum ssim]
    inv_n = 1.0 / float(BC * H * W)
    return sums[0] * inv_n, sums[1] * inv_n


# ------------------------------ glue (plain JAX) ----------------------------

def _interp_matrix(out_size, in_size, dtype=jnp.float32):
    """Row-interpolation matrix for bilinear resize with align_corners=True."""
    if out_size == 1:
        return jnp.zeros((1, in_size), dtype).at[0, 0].set(1.0)
    coords = jnp.arange(out_size, dtype=jnp.float32) * (in_size - 1) / (out_size - 1)
    i0 = jnp.clip(jnp.floor(coords).astype(jnp.int32), 0, max(in_size - 2, 0))
    i1 = jnp.clip(i0 + 1, 0, in_size - 1)
    w1 = coords - i0.astype(jnp.float32)
    w0 = 1.0 - w1
    rows = jnp.arange(out_size)
    m = jnp.zeros((out_size, in_size), dtype)
    m = m.at[rows, i0].add(w0).at[rows, i1].add(w1)
    return m


def bilinear_resize_ac(x, h_out, w_out):
    """F.interpolate(x, (h_out, w_out), mode='bilinear', align_corners=True), NCHW.

    Two explicit matmuls, larger reduction applied first, HIGH precision (the
    HIGHEST f32-emulation MXU path is unnecessary for a label resize).
    """
    B, C, H, W = x.shape
    mh = _interp_matrix(h_out, H)
    mw = _interp_matrix(w_out, W)
    prec = lax.Precision.HIGH
    if W * h_out * (H + w_out) <= H * w_out * (W + h_out):
        t = jnp.einsum('oh,bchw->bcow', mh, x, precision=prec)
        return jnp.einsum('bcow,pw->bcop', t, mw, precision=prec)
    t = jnp.einsum('bchw,pw->bchp', x, mw, precision=prec)
    return jnp.einsum('oh,bchp->bcop', mh, t, precision=prec)


def raw_video_loss(predicts, mid_results, labels, *,
                   l2_loss_weight, ssim_loss_weight, aux_loss_weight):
    l2_loss_value, ssim_loss_value = mse_ssim_pallas(predicts, labels)

    aux_loss_value = jnp.float32(0.0)
    if mid_results is not None and len(mid_results) != 0:
        # One bilinear resize of labels and one pallas_call per unique resolution;
        # same-resolution mid_results are batched along B.
        groups = {}
        for m in mid_results:
            groups.setdefault((m.shape[2], m.shape[3]), []).append(m)
        for (h, w), ms in groups.items():
            gt_down = bilinear_resize_ac(labels, h, w)
            if len(ms) == 1:
                m_stack, gt_stack = ms[0], gt_down
            else:
                m_stack = jnp.concatenate(ms, axis=0)
                gt_stack = jnp.concatenate([gt_down] * len(ms), axis=0)
            a_mse, a_ssim = mse_ssim_pallas(m_stack, gt_stack)
            # mean over the stacked batch == average of the per-mid means, so
            # multiplying by the group size recovers the per-mid sum.
            aux_loss_value = aux_loss_value + len(ms) * (a_mse + a_ssim)
        aux_loss_value = aux_loss_value / len(mid_results)

    l2_loss_value = l2_loss_value * l2_loss_weight
    ssim_loss_value = ssim_loss_value * ssim_loss_weight
    aux_loss_value = aux_loss_value * aux_loss_weight
    loss_all = l2_loss_value + ssim_loss_value + aux_loss_value
    return {'loss_all': loss_all, 'loss_mse': l2_loss_value,
            'loss_ssim': ssim_loss_value, 'loss_aux': aux_loss_value}


# ------------------------------ pure-JAX reference --------------------------

def _ssim_ref(x, y):
    xp = jnp.pad(x, ((0, 0), (0, 0), (1, 1), (1, 1)), mode='reflect')
    yp = jnp.pad(y, ((0, 0), (0, 0), (1, 1), (1, 1)), mode='reflect')
    H, W = x.shape[2], x.shape[3]

    def pool(v):
        s = 0.0
        for di in range(3):
            for dj in range(3):
                s = s + v[:, :, di:di + H, dj:dj + W]
        return s / 9.0

    mu_x, mu_y = pool(xp), pool(yp)
    sx = pool(xp * xp) - mu_x ** 2
    sy = pool(yp * yp) - mu_y ** 2
    sxy = pool(xp * yp) - mu_x * mu_y
    n = (2 * mu_x * mu_y + _C1) * (2 * sxy + _C2)
    d = (mu_x ** 2 + mu_y ** 2 + _C1) * (sx + sy + _C2)
    return jnp.clip((1 - n / d) / 2, 0.0, 1.0)


def _loss_ref(predicts, mid_results, labels, l2w, ssw, auxw):
    l2 = jnp.mean((predicts - labels) ** 2)
    ss = jnp.mean(_ssim_ref(predicts, labels))
    aux = 0.0
    if mid_results:
        for m in mid_results:
            gd = bilinear_resize_ac(labels, m.shape[2], m.shape[3])
            aux = aux + jnp.mean((m - gd) ** 2) + jnp.mean(_ssim_ref(m, gd))
        aux = aux / len(mid_results)
    return l2 * l2w + ss * ssw + aux * auxw


if __name__ == "__main__":
    key = jax.random.PRNGKey(0)
    k1, k2, k3, k4 = jax.random.split(key, 4)

    B, C, H, W = 2, 4, 16, 16
    predicts = jax.random.uniform(k1, (B, C, H, W), jnp.float32)
    labels = jax.random.uniform(k2, (B, C, H, W), jnp.float32)
    # Two same-resolution mid_results exercise the batched aux path.
    mid_results = [jax.random.uniform(k3, (B, C, 8, 8), jnp.float32),
                   jax.random.uniform(k4, (B, C, 8, 8), jnp.float32)]

    # args.* loss weights (module has no learned parameters).
    l2w, ssw, auxw = 1.0, 0.85, 0.5

    out = raw_video_loss(predicts, mid_results, labels,
                         l2_loss_weight=l2w, ssim_loss_weight=ssw,
                         aux_loss_weight=auxw)
    loss_all = jax.block_until_ready(out['loss_all'])

    ref = _loss_ref(predicts, mid_results, labels, l2w, ssw, auxw)
    assert jnp.allclose(loss_all, ref, rtol=1e-4, atol=1e-5), (loss_all, ref)

    print("KERNEL_OK")
</pallas_src>

<mosaic_0001>
module attributes {stable_mosaic.version = 11 : i64} {
  func.func @_mse_ssim_mxu_kernel(%arg0: i32, %arg1: memref<16x16xf32, #tpu.memory_space<vmem>>, %arg2: memref<64x64xf32, #tpu.memory_space<vmem>>, %arg3: memref<1x64x16xf32, #tpu.memory_space<vmem>>, %arg4: memref<1x64x16xf32, #tpu.memory_space<vmem>>, %arg5: memref<1x2x128xf32, #tpu.memory_space<vmem>>) attributes {dimension_semantics = [#tpu.dimension_semantics<parallel>], iteration_bounds = array<i64: 2>, scalar_prefetch = 0 : i64, scratch_operands = 0 : i64, tpu.core_type = #tpu.core_type<tc>, window_params = [{pipeline_mode = #tpu.pipeline_mode<synchronous>, transform_indices = @transform_0, window_bounds = array<i64: 16, 16>}, {pipeline_mode = #tpu.pipeline_mode<synchronous>, transform_indices = @transform_1, window_bounds = array<i64: 64, 64>}, {transform_indices = @transform_2, window_bounds = array<i64: 1, 64, 16>}, {transform_indices = @transform_3, window_bounds = array<i64: 1, 64, 16>}, {transform_indices = @transform_4, window_bounds = array<i64: 1, 2, 128>}]} {
    %c0 = arith.constant 0 : index
    %c0_0 = arith.constant 0 : index
    %c0_1 = arith.constant 0 : index
    %0 = vector.load %arg3[%c0, %c0_0, %c0_1] : memref<1x64x16xf32, #tpu.memory_space<vmem>>, vector<1x64x16xf32>
    %1 = vector.shape_cast %0 : vector<1x64x16xf32> to vector<64x16xf32>
    %c0_2 = arith.constant 0 : index
    %c0_3 = arith.constant 0 : index
    %c0_4 = arith.constant 0 : index
    %2 = vector.load %arg4[%c0_2, %c0_3, %c0_4] : memref<1x64x16xf32, #tpu.memory_space<vmem>>, vector<1x64x16xf32>
    %3 = vector.shape_cast %2 : vector<1x64x16xf32> to vector<64x16xf32>
    %4 = arith.subf %1, %3 : vector<64x16xf32>
    %5 = arith.mulf %4, %4 : vector<64x16xf32>
    %6 = vector.shape_cast %5 : vector<64x16xf32> to vector<1x64x16xf32>
    %cst = arith.constant dense<0.000000e+00> : vector<1xf32>
    %7 = vector.multi_reduction <add>, %6, %cst [1, 2] : vector<1x64x16xf32> to vector<1xf32>
    %8 = vector.shape_cast %7 : vector<1xf32> to vector<1x1x1xf32>
    %9 = vector.extract %8[0, 0, 0] : f32 from vector<1x1x1xf32>
    %c0_5 = arith.constant 0 : index
    %c0_6 = arith.constant 0 : index
    %10 = vector.load %arg1[%c0_5, %c0_6] : memref<16x16xf32, #tpu.memory_space<vmem>>, vector<16x16xf32>
    %c0_7 = arith.constant 0 : index
    %c0_8 = arith.constant 0 : index
    %11 = vector.load %arg2[%c0_7, %c0_8] : memref<64x64xf32, #tpu.memory_space<vmem>>, vector<64x64xf32>
    %cst_9 = arith.constant dense<0.000000e+00> : vector<64x16xf32>
    %12 = tpu.matmul %1, %10, %cst_9 {dimension_numbers = #tpu.dot_dimension_numbers<[1], [0], [0], [1], [0, 0, 1, 1], [], []>} : vector<64x16xf32>, vector<16x16xf32>, vector<64x16xf32> -> vector<64x16xf32>
    %cst_10 = arith.constant dense<0.000000e+00> : vector<64x16xf32>
    %13 = tpu.matmul %3, %10, %cst_10 {dimension_numbers = #tpu.dot_dimension_numbers<[1], [0], [0], [1], [0, 0, 1, 1], [], []>} : vector<64x16xf32>, vector<16x16xf32>, vector<64x16xf32> -> vector<64x16xf32>
    %14 = arith.mulf %1, %1 : vector<64x16xf32>
    %cst_11 = arith.constant dense<0.000000e+00> : vector<64x16xf32>
    %15 = tpu.matmul %14, %10, %cst_11 {dimension_numbers = #tpu.dot_dimension_numbers<[1], [0], [0], [1], [0, 0, 1, 1], [], []>} : vector<64x16xf32>, vector<16x16xf32>, vector<64x16xf32> -> vector<64x16xf32>
    %16 = arith.mulf %3, %3 : vector<64x16xf32>
    %cst_12 = arith.constant dense<0.000000e+00> : vector<64x16xf32>
    %17 = tpu.matmul %16, %10, %cst_12 {dimension_numbers = #tpu.dot_dimension_numbers<[1], [0], [0], [1], [0, 0, 1, 1], [], []>} : vector<64x16xf32>, vector<16x16xf32>, vector<64x16xf32> -> vector<64x16xf32>
    %18 = arith.mulf %1, %3 : vector<64x16xf32>
    %cst_13 = arith.constant dense<0.000000e+00> : vector<64x16xf32>
    %19 = tpu.matmul %18, %10, %cst_13 {dimension_numbers = #tpu.dot_dimension_numbers<[1], [0], [0], [1], [0, 0, 1, 1], [], []>} : vector<64x16xf32>, vector<16x16xf32>, vector<64x16xf32> -> vector<64x16xf32>
    %cst_14 = arith.constant dense<0.000000e+00> : vector<64x16xf32>
    %20 = tpu.matmul %11, %12, %cst_14 {dimension_numbers = #tpu.dot_dimension_numbers<[1], [0], [0], [1], [0, 0, 1, 1], [], []>} : vector<64x64xf32>, vector<64x16xf32>, vector<64x16xf32> -> vector<64x16xf32>
    %cst_15 = arith.constant dense<0.000000e+00> : vector<64x16xf32>
    %21 = tpu.matmul %11, %13, %cst_15 {dimension_numbers = #tpu.dot_dimension_numbers<[1], [0], [0], [1], [0, 0, 1, 1], [], []>} : vector<64x64xf32>, vector<64x16xf32>, vector<64x16xf32> -> vector<64x16xf32>
    %cst_16 = arith.constant dense<0.000000e+00> : vector<64x16xf32>
    %22 = tpu.matmul %11, %15, %cst_16 {dimension_numbers = #tpu.dot_dimension_numbers<[1], [0], [0], [1], [0, 0, 1, 1], [], []>} : vector<64x64xf32>, vector<64x16xf32>, vector<64x16xf32> -> vector<64x16xf32>
    %cst_17 = arith.constant dense<0.000000e+00> : vector<64x16xf32>
    %23 = tpu.matmul %11, %17, %cst_17 {dimension_numbers = #tpu.dot_dimension_numbers<[1], [0], [0], [1], [0, 0, 1, 1], [], []>} : vector<64x64xf32>, vector<64x16xf32>, vector<64x16xf32> -> vector<64x16xf32>
    %cst_18 = arith.constant dense<0.000000e+00> : vector<64x16xf32>
    %24 = tpu.matmul %11, %19, %cst_18 {dimension_numbers = #tpu.dot_dimension_numbers<[1], [0], [0], [1], [0, 0, 1, 1], [], []>} : vector<64x64xf32>, vector<64x16xf32>, vector<64x16xf32> -> vector<64x16xf32>
    %25 = arith.mulf %20, %20 : vector<64x16xf32>
    %26 = arith.mulf %21, %21 : vector<64x16xf32>
    %27 = arith.mulf %20, %21 : vector<64x16xf32>
    %28 = arith.subf %22, %25 : vector<64x16xf32>
    %29 = arith.subf %23, %26 : vector<64x16xf32>
    %30 = arith.subf %24, %27 : vector<64x16xf32>
    %cst_19 = arith.constant 2.000000e+00 : f32
    %31 = vector.broadcast %cst_19 : f32 to vector<64x16xf32>
    %32 = arith.mulf %31, %27 : vector<64x16xf32>
    %cst_20 = arith.constant 9.99999974E-5 : f32
    %33 = vector.broadcast %cst_20 : f32 to vector<64x16xf32>
    %34 = arith.addf %32, %33 : vector<64x16xf32>
    %cst_21 = arith.constant 2.000000e+00 : f32
    %35 = vector.broadcast %cst_21 : f32 to vector<64x16xf32>
    %36 = arith.mulf %35, %30 : vector<64x16xf32>
    %cst_22 = arith.constant 8.99999984E-4 : f32
    %37 = vector.broadcast %cst_22 : f32 to vector<64x16xf32>
    %38 = arith.addf %36, %37 : vector<64x16xf32>
    %39 = arith.mulf %34, %38 : vector<64x16xf32>
    %40 = arith.addf %25, %26 : vector<64x16xf32>
    %cst_23 = arith.constant 9.99999974E-5 : f32
    %41 = vector.broadcast %cst_23 : f32 to vector<64x16xf32>
    %42 = arith.addf %40, %41 : vector<64x16xf32>
    %43 = arith.addf %28, %29 : vector<64x16xf32>
    %cst_24 = arith.constant 8.99999984E-4 : f32
    %44 = vector.broadcast %cst_24 : f32 to vector<64x16xf32>
    %45 = arith.addf %43, %44 : vector<64x16xf32>
    %46 = arith.mulf %42, %45 : vector<64x16xf32>
    %47 = tpu.reciprocal %46 {approx = true} : vector<64x16xf32> -> vector<64x16xf32>
    %48 = arith.mulf %46, %47 : vector<64x16xf32>
    %cst_25 = arith.constant 2.000000e+00 : f32
    %49 = vector.broadcast %cst_25 : f32 to vector<64x16xf32>
    %50 = arith.subf %49, %48 : vector<64x16xf32>
    %51 = arith.mulf %47, %50 : vector<64x16xf32>
    %52 = arith.mulf %39, %51 : vector<64x16xf32>
    %cst_26 = arith.constant 1.000000e+00 : f32
    %53 = vector.broadcast %cst_26 : f32 to vector<64x16xf32>
    %54 = arith.subf %53, %52 : vector<64x16xf32>
    %cst_27 = arith.constant 5.000000e-01 : f32
    %55 = vector.broadcast %cst_27 : f32 to vector<64x16xf32>
    %56 = arith.mulf %54, %55 : vector<64x16xf32>
    %cst_28 = arith.constant 0.000000e+00 : f32
    %cst_29 = arith.constant 1.000000e+00 : f32
    %57 = vector.broadcast %cst_28 : f32 to vector<64x16xf32>
    %58 = arith.maximumf %57, %56 : vector<64x16xf32>
    %59 = vector.broadcast %cst_29 : f32 to vector<64x16xf32>
    %60 = arith.minimumf %59, %58 : vector<64x16xf32>
    %61 = vector.shape_cast %60 : vector<64x16xf32> to vector<1x64x16xf32>
    %cst_30 = arith.constant dense<0.000000e+00> : vector<1xf32>
    %62 = vector.multi_reduction <add>, %61, %cst_30 [1, 2] : vector<1x64x16xf32> to vector<1xf32>
    %63 = vector.shape_cast %62 : vector<1xf32> to vector<1x1x1xf32>
    %64 = vector.extract %63[0, 0, 0] : f32 from vector<1x1x1xf32>
    %65 = tpu.iota {dimensions = array<i32: 0>} : vector<2x128xi32>
    %c0_i32 = arith.constant 0 : i32
    %66 = vector.broadcast %c0_i32 : i32 to vector<2x128xi32>
    %67 = arith.cmpi eq, %65, %66 : vector<2x128xi32>
    %68 = vector.broadcast %9 : f32 to vector<2x128xf32>
    %69 = vector.broadcast %64 : f32 to vector<2x128xf32>
    %70 = arith.select %67, %68, %69 : vector<2x128xi1>, vector<2x128xf32>
    %c0_31 = arith.constant 0 : index
    %c0_32 = arith.constant 0 : index
    %c0_33 = arith.constant 0 : index
    %71 = vector.load %arg5[%c0_31, %c0_32, %c0_33] : memref<1x2x128xf32, #tpu.memory_space<vmem>>, vector<1x2x128xf32>
    %72 = vector.shape_cast %71 : vector<1x2x128xf32> to vector<2x128xf32>
    %73 = vector.shape_cast %70 : vector<2x128xf32> to vector<1x2x128xf32>
    tpu.vector_store %arg5[%c0_31, %c0_32, %c0_33], %73 {strides = array<i32>} : memref<1x2x128xf32, #tpu.memory_space<vmem>>, vector<1x2x128xf32>,
    return
  }
  func.func @transform_0(%arg0: i32) -> (i32, i32) {
    %c0_i32 = arith.constant 0 : i32
    %c0_i32_0 = arith.constant 0 : i32
    %c0_i32_1 = arith.constant 0 : i32
    return %c0_i32, %c0_i32_0 : i32, i32
  }
  func.func @transform_1(%arg0: i32) -> (i32, i32) {
    %c0_i32 = arith.constant 0 : i32
    %c0_i32_0 = arith.constant 0 : i32
    %c0_i32_1 = arith.constant 0 : i32
    return %c0_i32, %c0_i32_0 : i32, i32
  }
  func.func @transform_2(%arg0: i32) -> (i32, i32, i32) {
    %c0_i32 = arith.constant 0 : i32
    %c0_i32_0 = arith.constant 0 : i32
    %c0_i32_1 = arith.constant 0 : i32
    return %arg0, %c0_i32, %c0_i32_0 : i32, i32, i32
  }
  func.func @transform_3(%arg0: i32) -> (i32, i32, i32) {
    %c0_i32 = arith.constant 0 : i32
    %c0_i32_0 = arith.constant 0 : i32
    %c0_i32_1 = arith.constant 0 : i32
    return %arg0, %c0_i32, %c0_i32_0 : i32, i32, i32
  }
  func.func @transform_4(%arg0: i32) -> (i32, i32, i32) {
    %c0_i32 = arith.constant 0 : i32
    %c0_i32_0 = arith.constant 0 : i32
    %c0_i32_1 = arith.constant 0 : i32
    return %arg0, %c0_i32, %c0_i32_0 : i32, i32, i32
  }
}

</mosaic_0001>

<llo_original>
// kernel: tpu_custom_call.1
$region0: #{tpu_custom_call.1}
  #allocation0 [shape = 'u32[]', space=smem, size = 0x4, offset = 0x4, fixed_abs, tag = 'smem constant byte address 0x4 - core index']
  #allocation1 [shape = 'u32[144,128]{1,0:T(1,128)}', space=vmem, size = 0x12000, scoped, tag = 'internal scratch']
  %s0 = inlined_call_operand.vmem [shape: f32[16,16], index: 0, kind: input, shape index: {}]
  %s1 = inlined_call_operand.vmem [shape: f32[64,64], index: 1, kind: input, shape index: {}]
  %s2 = inlined_call_operand.vmem [shape: f32[2,64,16], index: 2, kind: input, shape index: {}]
  %s3 = inlined_call_operand.vmem [shape: f32[2,64,16], index: 3, kind: input, shape index: {}]
  %s4 = inlined_call_operand.hbm [shape: f32[2,2,128], index: 4, kind: output, shape index: {}]
  %s5 = sld [smem:[#allocation0]]
  $region49: #{tpu_custom_call.1} parent=0
    _
  %s7 = ssub.s32 1, %s5
  %s8 = scalar_select 0, %s7, %s5
  $region1: #{tpu_custom_call.1} parent=0
    #allocation2 [shape = 'u8[2048]{0}', space=vmem, size = 0x800, scoped, tag = 'output window, operand 0']
    #allocation3 [shape = 's32[2]{0}', space=sflag, size = 0x8, scoped, tag = 'scoped memory for tpu_custom_call.1']
    %9 = vsyncpa [#allocation3], 0
    %s10 = scalar_lea.sflag [#allocation3], 1
    %11 = vsyncpa %s10, 0
    loop: start=0, step=1, limit=4
    $region2: #{tpu_custom_call.1} parent=1 // loop_pre_header
      _
    $region3: #{tpu_custom_call.1} parent=1 // loop_header
      %s13 = sphi 0, %s17
      %p14 = scmp.ge.s32.totalorder %s13, 4
      %s21 = sphi 0, %s21
      %s23 = sphi 0, %s21
      %s24 = sphi 0, %s23
      %s38 = sphi 0, %s24
      %s42 = sphi 0, %s42
      %s44 = sphi 0, %s42
      %s45 = sphi 0, %s44
      %s59 = sphi 0, %s45
      %s65 = sphi 0, %s67
      %s68 = sphi 0, %s65
      %s69 = sphi 0, %s68
      %s85 = sphi 0, %s69
      %s91 = sphi 0, %s93
      %s94 = sphi 0, %s91
      %s95 = sphi 0, %s94
      %s111 = sphi 0, %s95
      %s117 = sphi 0, %s119
      %s120 = sphi 0, %s117
      %s121 = sphi 0, %s120
      %s137 = sphi 0, %s121
    $region4: #{tpu_custom_call.1} parent=1 // loop_header_branch
      %16 = sbr.rel (%p14) target = $region8
    $region5: #{tpu_custom_call.1} parent=1 // loop_body
      %s18 = ssub.s32 %s13, 1
      %s19 = ssub.s32 %s13, 2
      %s20 = sadd.s32 %s13, 1
      %s22 = sadd.s32 %s21, 1
      %p25 = scmp.eq.s32.totalorder %s13, 1
      %p26 = scmp.ne.s32.totalorder %s21, %s23
      %p27 = scmp.eq.s32.totalorder %s13, 0
      %p28 = por %p26, %p27
      %p29 = scmp.ne.s32.totalorder %s21, %s23
      %p30 = scmp.eq.s32.totalorder %s18, 1
      %p31 = por %p29, %p30
      %p32 = scmp.ne.s32.totalorder %s23, %s24
      %p33 = scmp.eq.s32.totalorder %s18, 0
      %p34 = por %p32, %p33
      %p35 = scmp.ne.s32.totalorder %s23, %s24
      %p36 = scmp.eq.s32.totalorder %s19, 1
      %p37 = por %p35, %p36
      %p39 = scmp.ne.s32.totalorder %s24, %s38
      %p40 = scmp.eq.s32.totalorder %s19, 0
      %p41 = por %p39, %p40
      %s43 = sadd.s32 %s42, 1
      %p46 = scmp.eq.s32.totalorder %s13, 1
      %p47 = scmp.ne.s32.totalorder %s42, %s44
      %p48 = scmp.eq.s32.totalorder %s13, 0
      %p49 = por %p47, %p48
      %p50 = scmp.ne.s32.totalorder %s42, %s44
      %p51 = scmp.eq.s32.totalorder %s18, 1
      %p52 = por %p50, %p51
      %p53 = scmp.ne.s32.totalorder %s44, %s45
      %p54 = scmp.eq.s32.totalorder %s18, 0
      %p55 = por %p53, %p54
      %p56 = scmp.ne.s32.totalorder %s44, %s45
      %p57 = scmp.eq.s32.totalorder %s19, 1
      %p58 = por %p56, %p57
      %p60 = scmp.ne.s32.totalorder %s45, %s59
      %p61 = scmp.eq.s32.totalorder %s19, 0
      %p62 = por %p60, %p61
      %s63 = ssub.s32 %s13, %s20
      %p64 = scmp.eq.s32.totalorder %s63, 0
      %s66 = sadd.s32 %s65, 1
      %s67 = scalar_select %p64, %s65, %s66
      %p70 = pneg %p64
      %p71 = scmp.eq.s32.totalorder %s13, 1
      %p72 = por %p70, %p71
      %p73 = scmp.ne.s32.totalorder %s65, %s68
      %p74 = scmp.eq.s32.totalorder %s13, 0
      %p75 = por %p73, %p74
      %p76 = scmp.ne.s32.totalorder %s65, %s68
      %p77 = scmp.eq.s32.totalorder %s18, 1
      %p78 = por %p76, %p77
      %p79 = scmp.ne.s32.totalorder %s68, %s69
      %p80 = scmp.eq.s32.totalorder %s18, 0
      %p81 = por %p79, %p80
      %p82 = scmp.ne.s32.totalorder %s68, %s69
      %p83 = scmp.eq.s32.totalorder %s19, 1
      %p84 = por %p82, %p83
      %p86 = scmp.ne.s32.totalorder %s69, %s85
      %p87 = scmp.eq.s32.totalorder %s19, 0
      %p88 = por %p86, %p87
      %s89 = ssub.s32 %s13, %s20
      %p90 = scmp.eq.s32.totalorder %s89, 0
      %s92 = sadd.s32 %s91, 1
      %s93 = scalar_select %p90, %s91, %s92
      %p96 = pneg %p90
      %p97 = scmp.eq.s32.totalorder %s13, 1
      %p98 = por %p96, %p97
      %p99 = scmp.ne.s32.totalorder %s91, %s94
      %p100 = scmp.eq.s32.totalorder %s13, 0
      %p101 = por %p99, %p100
      %p102 = scmp.ne.s32.totalorder %s91, %s94
      %p103 = scmp.eq.s32.totalorder %s18, 1
      %p104 = por %p102, %p103
      %p105 = scmp.ne.s32.totalorder %s94, %s95
      %p106 = scmp.eq.s32.totalorder %s18, 0
      %p107 = por %p105, %p106
      %p108 = scmp.ne.s32.totalorder %s94, %s95
      %p109 = scmp.eq.s32.totalorder %s19, 1
      %p110 = por %p108, %p109
      %p112 = scmp.ne.s32.totalorder %s95, %s111
      %p113 = scmp.eq.s32.totalorder %s19, 0
      %p114 = por %p112, %p113
      %s115 = ssub.s32 %s13, %s20
      %p116 = scmp.eq.s32.totalorder %s115, 0
      %s118 = sadd.s32 %s117, 1
      %s119 = scalar_select %p116, %s117, %s118
      %p122 = pneg %p116
      %p123 = scmp.eq.s32.totalorder %s13, 1
      %p124 = por %p122, %p123
      %p125 = scmp.ne.s32.totalorder %s117, %s120
      %p126 = scmp.eq.s32.totalorder %s13, 0
      %p127 = por %p125, %p126
      %p128 = scmp.ne.s32.totalorder %s117, %s120
      %p129 = scmp.eq.s32.totalorder %s18, 1
      %p130 = por %p128, %p129
      %p131 = scmp.ne.s32.totalorder %s120, %s121
      %p132 = scmp.eq.s32.totalorder %s18, 0
      %p133 = por %p131, %p132
      %p134 = scmp.ne.s32.totalorder %s120, %s121
      %p135 = scmp.eq.s32.totalorder %s19, 1
      %p136 = por %p134, %p135
      %p138 = scmp.ne.s32.totalorder %s121, %s137
      %p139 = scmp.eq.s32.totalorder %s19, 0
      %p140 = por %p138, %p139
      %p141 = scmp.le.s32.totalorder 1, %s13
      %p142 = scmp.lt.s32.totalorder %s13, 3
      %p143 = pnand %p141, %p142
      %p144 = pneg %p143
      // Predicated region
      $region9: #{tpu_custom_call.1} parent=5 // pred_check
        _
      $region10: #{tpu_custom_call.1} parent=5 // pred_check_branch
        %146 = sbr.rel (%p143) target = $region12
      $region11: #{tpu_custom_call.1} parent=5 // pred_region
        %s147 = ssub.s32 %s13, 1
        // Predicated region
        $region13: #{tpu_custom_call.1} parent=11 // pred_check
          %p148 = pneg %p34
        $region14: #{tpu_custom_call.1} parent=11 // pred_check_branch
          %150 = sbr.rel (%p148) target = $region16
        $region15: #{tpu_custom_call.1} parent=11 // pred_region
          _
        $region16: #{tpu_custom_call.1} parent=11 // pred_fallthru
          _
        // Predicated region
        $region17: #{tpu_custom_call.1} parent=11 // pred_check
          %p151 = pneg %p55
        $region18: #{tpu_custom_call.1} parent=11 // pred_check_branch
          %153 = sbr.rel (%p151) target = $region20
        $region19: #{tpu_custom_call.1} parent=11 // pred_region
          _
        $region20: #{tpu_custom_call.1} parent=11 // pred_fallthru
          _
      $region12: #{tpu_custom_call.1} parent=5 // pred_fallthru
        _
      %p154 = scmp.lt.s32.totalorder %s13, 2
      // Predicated region
      $region21: #{tpu_custom_call.1} parent=5 // pred_check
        %p155 = pneg %p154
      $region22: #{tpu_custom_call.1} parent=5 // pred_check_branch
        %157 = sbr.rel (%p155) target = $region24
      $region23: #{tpu_custom_call.1} parent=5 // pred_region
        // Predicated region
        $region25: #{tpu_custom_call.1} parent=23 // pred_check
          %p158 = pneg %p75
        $region26: #{tpu_custom_call.1} parent=23 // pred_check_branch
          %160 = sbr.rel (%p158) target = $region28
        $region27: #{tpu_custom_call.1} parent=23 // pred_region
          %p161 = scmp.lt.s32.totalorder %s13, 1
          %s162 = scalar_select %p161, %s13, 1
          %s163 = smul.addr %s162, 8
          %s164 = smul.addr %s163, 8
          %s165 = scalar_lea.vmem %s2, %s164
        $region28: #{tpu_custom_call.1} parent=23 // pred_fallthru
          _
        // Predicated region
        $region29: #{tpu_custom_call.1} parent=23 // pred_check
          %p166 = pneg %p101
        $region30: #{tpu_custom_call.1} parent=23 // pred_check_branch
          %168 = sbr.rel (%p166) target = $region32
        $region31: #{tpu_custom_call.1} parent=23 // pred_region
          %p169 = scmp.lt.s32.totalorder %s13, 1
          %s170 = scalar_select %p169, %s13, 1
          %s171 = smul.addr %s170, 8
          %s172 = smul.addr %s171, 8
          %s173 = scalar_lea.vmem %s3, %s172
        $region32: #{tpu_custom_call.1} parent=23 // pred_fallthru
          _
      $region24: #{tpu_custom_call.1} parent=5 // pred_fallthru
        _
      %p174 = scmp.le.s32.totalorder 1, %s13
      %p175 = scmp.lt.s32.totalorder %s13, 3
      %p176 = pnand %p174, %p175
      %p177 = pneg %p176
      // Predicated region
      $region33: #{tpu_custom_call.1} parent=5 // pred_check
        _
      $region34: #{tpu_custom_call.1} parent=5 // pred_check_branch
        %179 = sbr.rel (%p176) target = $region36
      $region35: #{tpu_custom_call.1} parent=5 // pred_region
        %s180 = ssub.s32 %s13, 1
        %p181 = pneg %p34
        %p182 = pneg %p31
        %p183 = pneg %p55
        %p184 = pneg %p52
        %p185 = scmp.lt.s32.totalorder %s18, 1
        %s186 = scalar_select %p185, %s18, 1
        %s187 = smul.addr %s186, 8
        %s188 = smul.addr %s187, 8
        %s189 = scalar_lea.vmem %s2, %s188
        %p190 = pneg %p81
        %p191 = pneg %p78
        %p192 = scmp.lt.s32.totalorder %s18, 1
        %s193 = scalar_select %p192, %s18, 1
        %s194 = smul.addr %s193, 8
        %s195 = smul.addr %s194, 8
        %s196 = scalar_lea.vmem %s3, %s195
        %p197 = pneg %p107
        %p198 = pneg %p104
        %p199 = pneg %p133
        %p200 = pneg %p130
        %s201 = sand.u32 %s120, 1
        %s202 = scalar_lea.sflag [#allocation3], %s201
        %s203 = sand.u32 %s120, 1
        %s204 = smul.addr %s203, 2
        %s205 = scalar_lea.vmem [#allocation2], %s204
        %p206 = scmp.lt.s32.totalorder %s18, 1
        %s207 = scalar_select %p206, %s18, 1
        %s208 = smul.addr %s207, 8
        %s209 = smul.addr %s208, 8
        %s210 = scalar_lea.vmem %s2, %s209
        %p211 = scmp.lt.s32.totalorder %s18, 1
        %s212 = scalar_select %p211, %s18, 1
        %s213 = smul.addr %s212, 8
        %s214 = smul.addr %s213, 8
        %s215 = scalar_lea.vmem %s3, %s214
        %v216 = vld [vmem:[%s210] sm:$0xff]
        %v217 = vld [vmem:[%s210 + $0x8] sm:$0xff]
        %v218 = vld [vmem:[%s210 + $0x10] sm:$0xff]
        %v219 = vld [vmem:[%s210 + $0x18] sm:$0xff]
        %v220 = vld [vmem:[%s210 + $0x20] sm:$0xff]
        %v221 = vld [vmem:[%s210 + $0x28] sm:$0xff]
        %v222 = vld [vmem:[%s210 + $0x30] sm:$0xff]
        %v223 = vld [vmem:[%s210 + $0x38] sm:$0xff]
        %v224 = vld [vmem:[%s215] sm:$0xff]
        %v225 = vld [vmem:[%s215 + $0x8] sm:$0xff]
        %v226 = vld [vmem:[%s215 + $0x10] sm:$0xff]
        %v227 = vld [vmem:[%s215 + $0x18] sm:$0xff]
        %v228 = vld [vmem:[%s215 + $0x20] sm:$0xff]
        %v229 = vld [vmem:[%s215 + $0x28] sm:$0xff]
        %v230 = vld [vmem:[%s215 + $0x30] sm:$0xff]
        %v231 = vld [vmem:[%s215 + $0x38] sm:$0xff]
        %v232 = vsub.f32 %v216, %v224
        %v233 = vsub.f32 %v217, %v225
        %v234 = vsub.f32 %v218, %v226
        %v235 = vsub.f32 %v219, %v227
        %v236 = vsub.f32 %v220, %v228
        %v237 = vsub.f32 %v221, %v229
        %v238 = vsub.f32 %v222, %v230
        %v239 = vsub.f32 %v223, %v231
        %v240 = vmul.f32 %v232, %v232
        %v241 = vmul.f32 %v233, %v233
        %v242 = vmul.f32 %v234, %v234
        %v243 = vmul.f32 %v235, %v235
        %v244 = vmul.f32 %v236, %v236
        %v245 = vmul.f32 %v237, %v237
        %v246 = vmul.f32 %v238, %v238
        %v247 = vmul.f32 %v239, %v239
        %vm248 = vcmask 130048
        %v249 = vsel %vm248, %v240, 0.0
        %v250 = vsel %vm248, %v241, 0.0
        %v251 = vadd.f32 %v249, %v250
        %v252 = vsel %vm248, %v242, 0.0
        %v253 = vadd.f32 %v251, %v252
        %v254 = vsel %vm248, %v243, 0.0
        %v255 = vadd.f32 %v253, %v254
        %v256 = vsel %vm248, %v244, 0.0
        %v257 = vadd.f32 %v255, %v256
        %v258 = vsel %vm248, %v245, 0.0
        %v259 = vadd.f32 %v257, %v258
        %v260 = vsel %vm248, %v246, 0.0
        %v261 = vadd.f32 %v259, %v260
        %v262 = vsel %vm248, %v247, 0.0
        %v263 = vadd.f32 %v261, %v262
        %264 = vadd.xlane.f32.xlu0 %v263
        %v265 = vpop.xlane.xlu0 %264
        %v266 = vrot.slane %v265, 4
        %v267 = vadd.f32 %v265, %v266
        %v268 = vrot.slane %v267, 2
        %v269 = vadd.f32 %v267, %v268
        %v270 = vrot.slane %v269, 1
        %v271 = vadd.f32 %v269, %v270
        %s272 = vtos %v271
        %v273 = vld [vmem:[%s0] sm:$0xff]
        %v274 = vld [vmem:[%s0 + $0x8] sm:$0xff]
        %v275 = vld [vmem:[%s1] sm:$0xff]
        %v276 = vld [vmem:[%s1 + $0x8] sm:$0xff]
        %v277 = vld [vmem:[%s1 + $0x10] sm:$0xff]
        %v278 = vld [vmem:[%s1 + $0x18] sm:$0xff]
        %v279 = vld [vmem:[%s1 + $0x20] sm:$0xff]
        %v280 = vld [vmem:[%s1 + $0x28] sm:$0xff]
        %v281 = vld [vmem:[%s1 + $0x30] sm:$0xff]
        %v282 = vld [vmem:[%s1 + $0x38] sm:$0xff]
        %v284 = vsel %vm248, %v216, 0
        %v287 = vsel %vm248, %v217, 0
        %v290 = vsel %vm248, %v218, 0
        %v293 = vsel %vm248, %v219, 0
        %v296 = vsel %vm248, %v220, 0
        %v299 = vsel %vm248, %v221, 0
        %v302 = vsel %vm248, %v222, 0
        %v305 = vsel %vm248, %v223, 0
        %307 = vmatprep.subr.mxu0 0.0
        %308 = vmatpush1.msra.mxu0 0.0
        %309 = vmatprep.subr.mxu0 0.0
        %310 = vmatpush1.msra.mxu0 0.0
        %311 = vmatprep.subr.mxu0 0.0
        %312 = vmatpush1.msra.mxu0 0.0
        %313 = vmatprep.subr.mxu0 0.0
        %314 = vmatpush1.msra.mxu0 0.0
        %315 = vmatprep.subr.mxu0 0.0
        %316 = vmatpush1.msra.mxu0 0.0
        %317 = vmatprep.subr.mxu0 0.0
        %318 = vmatpush1.msra.mxu0 0.0
        %319 = vmatprep.subr.mxu0 0.0
        %320 = vmatpush1.msra.mxu0 0.0
        %321 = vmatprep.subr.mxu0 0.0
        %322 = vmatpush1.msra.mxu0 0.0
        %323 = vmatprep.subr.mxu0 0.0
        %324 = vmatpush1.msra.mxu0 0.0
        %325 = vmatprep.subr.mxu0 0.0
        %326 = vmatpush1.msra.mxu0 0.0
        %327 = vmatprep.subr.mxu0 0.0
        %328 = vmatpush1.msra.mxu0 0.0
        %329 = vmatprep.subr.mxu0 0.0
        %330 = vmatpush1.msra.mxu0 0.0
        %331 = vmatprep.subr.mxu0 0.0
        %332 = vmatpush1.msra.mxu0 0.0
        %333 = vmatprep.subr.mxu0 0.0
        %334 = vmatpush1.msra.mxu0 0.0
        %335 = vmatprep.subr.mxu0 0.0
        %336 = vmatpush1.msra.mxu0 %v274
        %337 = vmatprep.subr.mxu0 0.0
        %338 = vmatpush1.msra.mxu0 %v273
        %339 = vmatprep.subr.mxu0 0.0
        %340 = vmatpush2.msra.mxu0 0.0
        %341 = vmatprep.subr.mxu0 0.0
        %342 = vmatpush2.msra.mxu0 0.0
        %343 = vmatprep.subr.mxu0 0.0
        %344 = vmatpush2.msra.mxu0 0.0
        %345 = vmatprep.subr.mxu0 0.0
        %346 = vmatpush2.msra.mxu0 0.0
        %347 = vmatprep.subr.mxu0 0.0
        %348 = vmatpush2.msra.mxu0 0.0
        %349 = vmatprep.subr.mxu0 0.0
        %350 = vmatpush2.msra.mxu0 0.0
        %351 = vmatprep.subr.mxu0 0.0
        %352 = vmatpush2.msra.mxu0 0.0
        %353 = vmatprep.subr.mxu0 0.0
        %354 = vmatpush2.msra.mxu0 0.0
        %355 = vmatprep.subr.mxu0 0.0
        %356 = vmatpush2.msra.mxu0 0.0
        %357 = vmatprep.subr.mxu0 0.0
        %358 = vmatpush2.msra.mxu0 0.0
        %359 = vmatprep.subr.mxu0 0.0
        %360 = vmatpush2.msra.mxu0 0.0
        %361 = vmatprep.subr.mxu0 0.0
        %362 = vmatpush2.msra.mxu0 0.0
        %363 = vmatprep.subr.mxu0 0.0
        %364 = vmatpush2.msra.mxu0 0.0
        %365 = vmatprep.subr.mxu0 0.0
        %366 = vmatpush2.msra.mxu0 0.0
        %367 = vmatprep.subr.mxu0 0.0
        %368 = vmatpush2.msra.mxu0 0.0
        %369 = vmatprep.subr.mxu0 0.0
        %370 = vmatpush2.msra.mxu0 0.0
        %371 = vmatprep.mubr.f32.mxu0 0.0
        %372 = vmatmul.mubr.f32.gmra.mxu0 %v284
        %v373 = vpop.f32.mrf.mxu0
        %v374 = vadd.f32 0.0, %v373
        %v375 = vpop.f32.mrf.mxu0
        %376 = vmatprep.mubr.f32.mxu0 0.0
        %377 = vmatmul.mubr.f32.gmra.mxu0 %v287
        %v378 = vpop.f32.mrf.mxu0
        %v379 = vadd.f32 0.0, %v378
        %v380 = vpop.f32.mrf.mxu0
        %381 = vmatprep.mubr.f32.mxu0 0.0
        %382 = vmatmul.mubr.f32.gmra.mxu0 %v290
        %v383 = vpop.f32.mrf.mxu0
        %v384 = vadd.f32 0.0, %v383
        %v385 = vpop.f32.mrf.mxu0
        %386 = vmatprep.mubr.f32.mxu0 0.0
        %387 = vmatmul.mubr.f32.gmra.mxu0 %v293
        %v388 = vpop.f32.mrf.mxu0
        %v389 = vadd.f32 0.0, %v388
        %v390 = vpop.f32.mrf.mxu0
        %391 = vmatprep.mubr.f32.mxu0 0.0
        %392 = vmatmul.mubr.f32.gmra.mxu0 %v296
        %v393 = vpop.f32.mrf.mxu0
        %v394 = vadd.f32 0.0, %v393
        %v395 = vpop.f32.mrf.mxu0
        %396 = vmatprep.mubr.f32.mxu0 0.0
        %397 = vmatmul.mubr.f32.gmra.mxu0 %v299
        %v398 = vpop.f32.mrf.mxu0
        %v399 = vadd.f32 0.0, %v398
        %v400 = vpop.f32.mrf.mxu0
        %401 = vmatprep.mubr.f32.mxu0 0.0
        %402 = vmatmul.mubr.f32.gmra.mxu0 %v302
        %v403 = vpop.f32.mrf.mxu0
        %v404 = vadd.f32 0.0, %v403
        %v405 = vpop.f32.mrf.mxu0
        %406 = vmatprep.mubr.f32.mxu0 0.0
        %407 = vmatmul.mubr.f32.gmra.mxu0 %v305
        %v408 = vpop.f32.mrf.mxu0
        %v409 = vadd.f32 0.0, %v408
        %v410 = vpop.f32.mrf.mxu0
        %411 = vdwg.mxu0
        %v413 = vsel %vm248, %v224, 0
        %v416 = vsel %vm248, %v225, 0
        %v419 = vsel %vm248, %v226, 0
        %v422 = vsel %vm248, %v227, 0
        %v425 = vsel %vm248, %v228, 0
        %v428 = vsel %vm248, %v229, 0
        %v431 = vsel %vm248, %v230, 0
        %v434 = vsel %vm248, %v231, 0
        %436 = vmatprep.subr.mxu0 0.0
        %437 = vmatpush1.msra.mxu0 0.0
        %438 = vmatprep.subr.mxu0 0.0
        %439 = vmatpush1.msra.mxu0 0.0
        %440 = vmatprep.subr.mxu0 0.0
        %441 = vmatpush1.msra.mxu0 0.0
        %442 = vmatprep.subr.mxu0 0.0
        %443 = vmatpush1.msra.mxu0 0.0
        %444 = vmatprep.subr.mxu0 0.0
        %445 = vmatpush1.msra.mxu0 0.0
        %446 = vmatprep.subr.mxu0 0.0
        %447 = vmatpush1.msra.mxu0 0.0
        %448 = vmatprep.subr.mxu0 0.0
        %449 = vmatpush1.msra.mxu0 0.0
        %450 = vmatprep.subr.mxu0 0.0
        %451 = vmatpush1.msra.mxu0 0.0
        %452 = vmatprep.subr.mxu0 0.0
        %453 = vmatpush1.msra.mxu0 0.0
        %454 = vmatprep.subr.mxu0 0.0
        %455 = vmatpush1.msra.mxu0 0.0
        %456 = vmatprep.subr.mxu0 0.0
        %457 = vmatpush1.msra.mxu0 0.0
        %458 = vmatprep.subr.mxu0 0.0
        %459 = vmatpush1.msra.mxu0 0.0
        %460 = vmatprep.subr.mxu0 0.0
        %461 = vmatpush1.msra.mxu0 0.0
        %462 = vmatprep.subr.mxu0 0.0
        %463 = vmatpush1.msra.mxu0 0.0
        %464 = vmatprep.subr.mxu0 0.0
        %465 = vmatpush1.msra.mxu0 %v274
        %466 = vmatprep.subr.mxu0 0.0
        %467 = vmatpush1.msra.mxu0 %v273
        %468 = vmatprep.subr.mxu0 0.0
        %469 = vmatpush2.msra.mxu0 0.0
        %470 = vmatprep.subr.mxu0 0.0
        %471 = vmatpush2.msra.mxu0 0.0
        %472 = vmatprep.subr.mxu0 0.0
        %473 = vmatpush2.msra.mxu0 0.0
        %474 = vmatprep.subr.mxu0 0.0
        %475 = vmatpush2.msra.mxu0 0.0
        %476 = vmatprep.subr.mxu0 0.0
        %477 = vmatpush2.msra.mxu0 0.0
        %478 = vmatprep.subr.mxu0 0.0
        %479 = vmatpush2.msra.mxu0 0.0
        %480 = vmatprep.subr.mxu0 0.0
        %481 = vmatpush2.msra.mxu0 0.0
        %482 = vmatprep.subr.mxu0 0.0
        %483 = vmatpush2.msra.mxu0 0.0
        %484 = vmatprep.subr.mxu0 0.0
        %485 = vmatpush2.msra.mxu0 0.0
        %486 = vmatprep.subr.mxu0 0.0
        %487 = vmatpush2.msra.mxu0 0.0
        %488 = vmatprep.subr.mxu0 0.0
        %489 = vmatpush2.msra.mxu0 0.0
        %490 = vmatprep.subr.mxu0 0.0
        %491 = vmatpush2.msra.mxu0 0.0
        %492 = vmatprep.subr.mxu0 0.0
        %493 = vmatpush2.msra.mxu0 0.0
        %494 = vmatprep.subr.mxu0 0.0
        %495 = vmatpush2.msra.mxu0 0.0
        %496 = vmatprep.subr.mxu0 0.0
        %497 = vmatpush2.msra.mxu0 0.0
        %498 = vmatprep.subr.mxu0 0.0
        %499 = vmatpush2.msra.mxu0 0.0
        %500 = vmatprep.mubr.f32.mxu0 0.0
        %501 = vmatmul.mubr.f32.gmra.mxu0 %v413
        %v502 = vpop.f32.mrf.mxu0
        %v503 = vadd.f32 0.0, %v502
        %v504 = vpop.f32.mrf.mxu0
        %505 = vmatprep.mubr.f32.mxu0 0.0
        %506 = vmatmul.mubr.f32.gmra.mxu0 %v416
        %v507 = vpop.f32.mrf.mxu0
        %v508 = vadd.f32 0.0, %v507
        %v509 = vpop.f32.mrf.mxu0
        %510 = vmatprep.mubr.f32.mxu0 0.0
        %511 = vmatmul.mubr.f32.gmra.mxu0 %v419
        %v512 = vpop.f32.mrf.mxu0
        %v513 = vadd.f32 0.0, %v512
        %v514 = vpop.f32.mrf.mxu0
        %515 = vmatprep.mubr.f32.mxu0 0.0
        %516 = vmatmul.mubr.f32.gmra.mxu0 %v422
        %v517 = vpop.f32.mrf.mxu0
        %v518 = vadd.f32 0.0, %v517
        %v519 = vpop.f32.mrf.mxu0
        %520 = vmatprep.mubr.f32.mxu0 0.0
        %521 = vmatmul.mubr.f32.gmra.mxu0 %v425
        %v522 = vpop.f32.mrf.mxu0
        %v523 = vadd.f32 0.0, %v522
        %v524 = vpop.f32.mrf.mxu0
        %525 = vmatprep.mubr.f32.mxu0 0.0
        %526 = vmatmul.mubr.f32.gmra.mxu0 %v428
        %v527 = vpop.f32.mrf.mxu0
        %v528 = vadd.f32 0.0, %v527
        %v529 = vpop.f32.mrf.mxu0
        %530 = vmatprep.mubr.f32.mxu0 0.0
        %531 = vmatmul.mubr.f32.gmra.mxu0 %v431
        %v532 = vpop.f32.mrf.mxu0
        %v533 = vadd.f32 0.0, %v532
        %v534 = vpop.f32.mrf.mxu0
        %535 = vmatprep.mubr.f32.mxu0 0.0
        %536 = vmatmul.mubr.f32.gmra.mxu0 %v434
        %v537 = vpop.f32.mrf.mxu0
        %v538 = vadd.f32 0.0, %v537
        %v539 = vpop.f32.mrf.mxu0
        %540 = vdwg.mxu0
        %v541 = vmul.f32 %v216, %v216
        %v542 = vmul.f32 %v217, %v217
        %v543 = vmul.f32 %v218, %v218
        %v544 = vmul.f32 %v219, %v219
        %v545 = vmul.f32 %v220, %v220
        %v546 = vmul.f32 %v221, %v221
        %v547 = vmul.f32 %v222, %v222
        %v548 = vmul.f32 %v223, %v223
        %v550 = vsel %vm248, %v541, 0
        %v553 = vsel %vm248, %v542, 0
        %v556 = vsel %vm248, %v543, 0
        %v559 = vsel %vm248, %v544, 0
        %v562 = vsel %vm248, %v545, 0
        %v565 = vsel %vm248, %v546, 0
        %v568 = vsel %vm248, %v547, 0
        %v571 = vsel %vm248, %v548, 0
        %573 = vmatprep.subr.mxu0 0.0
        %574 = vmatpush1.msra.mxu0 0.0
        %575 = vmatprep.subr.mxu0 0.0
        %576 = vmatpush1.msra.mxu0 0.0
        %577 = vmatprep.subr.mxu0 0.0
        %578 = vmatpush1.msra.mxu0 0.0
        %579 = vmatprep.subr.mxu0 0.0
        %580 = vmatpush1.msra.mxu0 0.0
        %581 = vmatprep.subr.mxu0 0.0
        %582 = vmatpush1.msra.mxu0 0.0
        %583 = vmatprep.subr.mxu0 0.0
        %584 = vmatpush1.msra.mxu0 0.0
        %585 = vmatprep.subr.mxu0 0.0
        %586 = vmatpush1.msra.mxu0 0.0
        %587 = vmatprep.subr.mxu0 0.0
        %588 = vmatpush1.msra.mxu0 0.0
        %589 = vmatprep.subr.mxu0 0.0
        %590 = vmatpush1.msra.mxu0 0.0
        %591 = vmatprep.subr.mxu0 0.0
        %592 = vmatpush1.msra.mxu0 0.0
        %593 = vmatprep.subr.mxu0 0.0
        %594 = vmatpush1.msra.mxu0 0.0
        %595 = vmatprep.subr.mxu0 0.0
        %596 = vmatpush1.msra.mxu0 0.0
        %597 = vmatprep.subr.mxu0 0.0
        %598 = vmatpush1.msra.mxu0 0.0
        %599 = vmatprep.subr.mxu0 0.0
        %600 = vmatpush1.msra.mxu0 0.0
        %601 = vmatprep.subr.mxu0 0.0
        %602 = vmatpush1.msra.mxu0 %v274
        %603 = vmatprep.subr.mxu0 0.0
        %604 = vmatpush1.msra.mxu0 %v273
        %605 = vmatprep.subr.mxu0 0.0
        %606 = vmatpush2.msra.mxu0 0.0
        %607 = vmatprep.subr.mxu0 0.0
        %608 = vmatpush2.msra.mxu0 0.0
        %609 = vmatprep.subr.mxu0 0.0
        %610 = vmatpush2.msra.mxu0 0.0
        %611 = vmatprep.subr.mxu0 0.0
        %612 = vmatpush2.msra.mxu0 0.0
        %613 = vmatprep.subr.mxu0 0.0
        %614 = vmatpush2.msra.mxu0 0.0
        %615 = vmatprep.subr.mxu0 0.0
        %616 = vmatpush2.msra.mxu0 0.0
        %617 = vmatprep.subr.mxu0 0.0
        %618 = vmatpush2.msra.mxu0 0.0
        %619 = vmatprep.subr.mxu0 0.0
        %620 = vmatpush2.msra.mxu0 0.0
        %621 = vmatprep.subr.mxu0 0.0
        %622 = vmatpush2.msra.mxu0 0.0
        %623 = vmatprep.subr.mxu0 0.0
        %624 = vmatpush2.msra.mxu0 0.0
        %625 = vmatprep.subr.mxu0 0.0
        %626 = vmatpush2.msra.mxu0 0.0
        %627 = vmatprep.subr.mxu0 0.0
        %628 = vmatpush2.msra.mxu0 0.0
        %629 = vmatprep.subr.mxu0 0.0
        %630 = vmatpush2.msra.mxu0 0.0
        %631 = vmatprep.subr.mxu0 0.0
        %632 = vmatpush2.msra.mxu0 0.0
        %633 = vmatprep.subr.mxu0 0.0
        %634 = vmatpush2.msra.mxu0 0.0
        %635 = vmatprep.subr.mxu0 0.0
        %636 = vmatpush2.msra.mxu0 0.0
        %637 = vmatprep.mubr.f32.mxu0 0.0
        %638 = vmatmul.mubr.f32.gmra.mxu0 %v550
        %v639 = vpop.f32.mrf.mxu0
        %v640 = vadd.f32 0.0, %v639
        %v641 = vpop.f32.mrf.mxu0
        %642 = vmatprep.mubr.f32.mxu0 0.0
        %643 = vmatmul.mubr.f32.gmra.mxu0 %v553
        %v644 = vpop.f32.mrf.mxu0
        %v645 = vadd.f32 0.0, %v644
        %v646 = vpop.f32.mrf.mxu0
        %647 = vmatprep.mubr.f32.mxu0 0.0
        %648 = vmatmul.mubr.f32.gmra.mxu0 %v556
        %v649 = vpop.f32.mrf.mxu0
        %v650 = vadd.f32 0.0, %v649
        %v651 = vpop.f32.mrf.mxu0
        %652 = vmatprep.mubr.f32.mxu0 0.0
        %653 = vmatmul.mubr.f32.gmra.mxu0 %v559
        %v654 = vpop.f32.mrf.mxu0
        %v655 = vadd.f32 0.0, %v654
        %v656 = vpop.f32.mrf.mxu0
        %657 = vmatprep.mubr.f32.mxu0 0.0
        %658 = vmatmul.mubr.f32.gmra.mxu0 %v562
        %v659 = vpop.f32.mrf.mxu0
        %v660 = vadd.f32 0.0, %v659
        %v661 = vpop.f32.mrf.mxu0
        %662 = vmatprep.mubr.f32.mxu0 0.0
        %663 = vmatmul.mubr.f32.gmra.mxu0 %v565
        %v664 = vpop.f32.mrf.mxu0
        %v665 = vadd.f32 0.0, %v664
        %v666 = vpop.f32.mrf.mxu0
        %667 = vmatprep.mubr.f32.mxu0 0.0
        %668 = vmatmul.mubr.f32.gmra.mxu0 %v568
        %v669 = vpop.f32.mrf.mxu0
        %v670 = vadd.f32 0.0, %v669
        %v671 = vpop.f32.mrf.mxu0
        %672 = vmatprep.mubr.f32.mxu0 0.0
        %673 = vmatmul.mubr.f32.gmra.mxu0 %v571
        %v674 = vpop.f32.mrf.mxu0
        %v675 = vadd.f32 0.0, %v674
        %v676 = vpop.f32.mrf.mxu0
        %677 = vdwg.mxu0
        %v678 = vmul.f32 %v224, %v224
        %v679 = vmul.f32 %v225, %v225
        %v680 = vmul.f32 %v226, %v226
        %v681 = vmul.f32 %v227, %v227
        %v682 = vmul.f32 %v228, %v228
        %v683 = vmul.f32 %v229, %v229
        %v684 = vmul.f32 %v230, %v230
        %v685 = vmul.f32 %v231, %v231
        %v687 = vsel %vm248, %v678, 0
        %v690 = vsel %vm248, %v679, 0
        %v693 = vsel %vm248, %v680, 0
        %v696 = vsel %vm248, %v681, 0
        %v699 = vsel %vm248, %v682, 0
        %v702 = vsel %vm248, %v683, 0
        %v705 = vsel %vm248, %v684, 0
        %v708 = vsel %vm248, %v685, 0
        %710 = vmatprep.subr.mxu0 0.0
        %711 = vmatpush1.msra.mxu0 0.0
        %712 = vmatprep.subr.mxu0 0.0
        %713 = vmatpush1.msra.mxu0 0.0
        %714 = vmatprep.subr.mxu0 0.0
        %715 = vmatpush1.msra.mxu0 0.0
        %716 = vmatprep.subr.mxu0 0.0
        %717 = vmatpush1.msra.mxu0 0.0
        %718 = vmatprep.subr.mxu0 0.0
        %719 = vmatpush1.msra.mxu0 0.0
        %720 = vmatprep.subr.mxu0 0.0
        %721 = vmatpush1.msra.mxu0 0.0
        %722 = vmatprep.subr.mxu0 0.0
        %723 = vmatpush1.msra.mxu0 0.0
        %724 = vmatprep.subr.mxu0 0.0
        %725 = vmatpush1.msra.mxu0 0.0
        %726 = vmatprep.subr.mxu0 0.0
        %727 = vmatpush1.msra.mxu0 0.0
        %728 = vmatprep.subr.mxu0 0.0
        %729 = vmatpush1.msra.mxu0 0.0
        %730 = vmatprep.subr.mxu0 0.0
        %731 = vmatpush1.msra.mxu0 0.0
        %732 = vmatprep.subr.mxu0 0.0
        %733 = vmatpush1.msra.mxu0 0.0
        %734 = vmatprep.subr.mxu0 0.0
        %735 = vmatpush1.msra.mxu0 0.0
        %736 = vmatprep.subr.mxu0 0.0
        %737 = vmatpush1.msra.mxu0 0.0
        %738 = vmatprep.subr.mxu0 0.0
        %739 = vmatpush1.msra.mxu0 %v274
        %740 = vmatprep.subr.mxu0 0.0
        %741 = vmatpush1.msra.mxu0 %v273
        %742 = vmatprep.subr.mxu0 0.0
        %743 = vmatpush2.msra.mxu0 0.0
        %744 = vmatprep.subr.mxu0 0.0
        %745 = vmatpush2.msra.mxu0 0.0
        %746 = vmatprep.subr.mxu0 0.0
        %747 = vmatpush2.msra.mxu0 0.0
        %748 = vmatprep.subr.mxu0 0.0
        %749 = vmatpush2.msra.mxu0 0.0
        %750 = vmatprep.subr.mxu0 0.0
        %751 = vmatpush2.msra.mxu0 0.0
        %752 = vmatprep.subr.mxu0 0.0
        %753 = vmatpush2.msra.mxu0 0.0
        %754 = vmatprep.subr.mxu0 0.0
        %755 = vmatpush2.msra.mxu0 0.0
        %756 = vmatprep.subr.mxu0 0.0
        %757 = vmatpush2.msra.mxu0 0.0
        %758 = vmatprep.subr.mxu0 0.0
        %759 = vmatpush2.msra.mxu0 0.0
        %760 = vmatprep.subr.mxu0 0.0
        %761 = vmatpush2.msra.mxu0 0.0
        %762 = vmatprep.subr.mxu0 0.0
        %763 = vmatpush2.msra.mxu0 0.0
        %764 = vmatprep.subr.mxu0 0.0
        %765 = vmatpush2.msra.mxu0 0.0
        %766 = vmatprep.subr.mxu0 0.0
        %767 = vmatpush2.msra.mxu0 0.0
        %768 = vmatprep.subr.mxu0 0.0
        %769 = vmatpush2.msra.mxu0 0.0
        %770 = vmatprep.subr.mxu0 0.0
        %771 = vmatpush2.msra.mxu0 0.0
        %772 = vmatprep.subr.mxu0 0.0
        %773 = vmatpush2.msra.mxu0 0.0
        %774 = vmatprep.mubr.f32.mxu0 0.0
        %775 = vmatmul.mubr.f32.gmra.mxu0 %v687
        %v776 = vpop.f32.mrf.mxu0
        %v777 = vadd.f32 0.0, %v776
        %v778 = vpop.f32.mrf.mxu0
        %779 = vmatprep.mubr.f32.mxu0 0.0
        %780 = vmatmul.mubr.f32.gmra.mxu0 %v690
        %v781 = vpop.f32.mrf.mxu0
        %v782 = vadd.f32 0.0, %v781
        %v783 = vpop.f32.mrf.mxu0
        %784 = vmatprep.mubr.f32.mxu0 0.0
        %785 = vmatmul.mubr.f32.gmra.mxu0 %v693
        %v786 = vpop.f32.mrf.mxu0
        %v787 = vadd.f32 0.0, %v786
        %v788 = vpop.f32.mrf.mxu0
        %789 = vmatprep.mubr.f32.mxu0 0.0
        %790 = vmatmul.mubr.f32.gmra.mxu0 %v696
        %v791 = vpop.f32.mrf.mxu0
        %v792 = vadd.f32 0.0, %v791
        %v793 = vpop.f32.mrf.mxu0
        %794 = vmatprep.mubr.f32.mxu0 0.0
        %795 = vmatmul.mubr.f32.gmra.mxu0 %v699
        %v796 = vpop.f32.mrf.mxu0
        %v797 = vadd.f32 0.0, %v796
        %v798 = vpop.f32.mrf.mxu0
        %799 = vmatprep.mubr.f32.mxu0 0.0
        %800 = vmatmul.mubr.f32.gmra.mxu0 %v702
        %v801 = vpop.f32.mrf.mxu0
        %v802 = vadd.f32 0.0, %v801
        %v803 = vpop.f32.mrf.mxu0
        %804 = vmatprep.mubr.f32.mxu0 0.0
        %805 = vmatmul.mubr.f32.gmra.mxu0 %v705
        %v806 = vpop.f32.mrf.mxu0
        %v807 = vadd.f32 0.0, %v806
        %v808 = vpop.f32.mrf.mxu0
        %809 = vmatprep.mubr.f32.mxu0 0.0
        %810 = vmatmul.mubr.f32.gmra.mxu0 %v708
        %v811 = vpop.f32.mrf.mxu0
        %v812 = vadd.f32 0.0, %v811
        %v813 = vpop.f32.mrf.mxu0
        %814 = vdwg.mxu0
        %v815 = vmul.f32 %v216, %v224
        %v816 = vmul.f32 %v217, %v225
        %v817 = vmul.f32 %v218, %v226
        %v818 = vmul.f32 %v219, %v227
        %v819 = vmul.f32 %v220, %v228
        %v820 = vmul.f32 %v221, %v229
        %v821 = vmul.f32 %v222, %v230
        %v822 = vmul.f32 %v223, %v231
        %v824 = vsel %vm248, %v815, 0
        %v827 = vsel %vm248, %v816, 0
        %v830 = vsel %vm248, %v817, 0
        %v833 = vsel %vm248, %v818, 0
        %v836 = vsel %vm248, %v819, 0
        %v839 = vsel %vm248, %v820, 0
        %v842 = vsel %vm248, %v821, 0
        %v845 = vsel %vm248, %v822, 0
        %847 = vmatprep.subr.mxu0 0.0
        %848 = vmatpush1.msra.mxu0 0.0
        %849 = vmatprep.subr.mxu0 0.0
        %850 = vmatpush1.msra.mxu0 0.0
        %851 = vmatprep.subr.mxu0 0.0
        %852 = vmatpush1.msra.mxu0 0.0
        %853 = vmatprep.subr.mxu0 0.0
        %854 = vmatpush1.msra.mxu0 0.0
        %855 = vmatprep.subr.mxu0 0.0
        %856 = vmatpush1.msra.mxu0 0.0
        %857 = vmatprep.subr.mxu0 0.0
        %858 = vmatpush1.msra.mxu0 0.0
        %859 = vmatprep.subr.mxu0 0.0
        %860 = vmatpush1.msra.mxu0 0.0
        %861 = vmatprep.subr.mxu0 0.0
        %862 = vmatpush1.msra.mxu0 0.0
        %863 = vmatprep.subr.mxu0 0.0
        %864 = vmatpush1.msra.mxu0 0.0
        %865 = vmatprep.subr.mxu0 0.0
        %866 = vmatpush1.msra.mxu0 0.0
        %867 = vmatprep.subr.mxu0 0.0
        %868 = vmatpush1.msra.mxu0 0.0
        %869 = vmatprep.subr.mxu0 0.0
        %870 = vmatpush1.msra.mxu0 0.0
        %871 = vmatprep.subr.mxu0 0.0
        %872 = vmatpush1.msra.mxu0 0.0
        %873 = vmatprep.subr.mxu0 0.0
        %874 = vmatpush1.msra.mxu0 0.0
        %875 = vmatprep.subr.mxu0 0.0
        %876 = vmatpush1.msra.mxu0 %v274
        %877 = vmatprep.subr.mxu0 0.0
        %878 = vmatpush1.msra.mxu0 %v273
        %879 = vmatprep.subr.mxu0 0.0
        %880 = vmatpush2.msra.mxu0 0.0
        %881 = vmatprep.subr.mxu0 0.0
        %882 = vmatpush2.msra.mxu0 0.0
        %883 = vmatprep.subr.mxu0 0.0
        %884 = vmatpush2.msra.mxu0 0.0
        %885 = vmatprep.subr.mxu0 0.0
        %886 = vmatpush2.msra.mxu0 0.0
        %887 = vmatprep.subr.mxu0 0.0
        %888 = vmatpush2.msra.mxu0 0.0
        %889 = vmatprep.subr.mxu0 0.0
        %890 = vmatpush2.msra.mxu0 0.0
        %891 = vmatprep.subr.mxu0 0.0
        %892 = vmatpush2.msra.mxu0 0.0
        %893 = vmatprep.subr.mxu0 0.0
        %894 = vmatpush2.msra.mxu0 0.0
        %895 = vmatprep.subr.mxu0 0.0
        %896 = vmatpush2.msra.mxu0 0.0
        %897 = vmatprep.subr.mxu0 0.0
        %898 = vmatpush2.msra.mxu0 0.0
        %899 = vmatprep.subr.mxu0 0.0
        %900 = vmatpush2.msra.mxu0 0.0
        %901 = vmatprep.subr.mxu0 0.0
        %902 = vmatpush2.msra.mxu0 0.0
        %903 = vmatprep.subr.mxu0 0.0
        %904 = vmatpush2.msra.mxu0 0.0
        %905 = vmatprep.subr.mxu0 0.0
        %906 = vmatpush2.msra.mxu0 0.0
        %907 = vmatprep.subr.mxu0 0.0
        %908 = vmatpush2.msra.mxu0 0.0
        %909 = vmatprep.subr.mxu0 0.0
        %910 = vmatpush2.msra.mxu0 0.0
        %911 = vmatprep.mubr.f32.mxu0 0.0
        %912 = vmatmul.mubr.f32.gmra.mxu0 %v824
        %v913 = vpop.f32.mrf.mxu0
        %v914 = vadd.f32 0.0, %v913
        %v915 = vpop.f32.mrf.mxu0
        %916 = vmatprep.mubr.f32.mxu0 0.0
        %917 = vmatmul.mubr.f32.gmra.mxu0 %v827
        %v918 = vpop.f32.mrf.mxu0
        %v919 = vadd.f32 0.0, %v918
        %v920 = vpop.f32.mrf.mxu0
        %921 = vmatprep.mubr.f32.mxu0 0.0
        %922 = vmatmul.mubr.f32.gmra.mxu0 %v830
        %v923 = vpop.f32.mrf.mxu0
        %v924 = vadd.f32 0.0, %v923
        %v925 = vpop.f32.mrf.mxu0
        %926 = vmatprep.mubr.f32.mxu0 0.0
        %927 = vmatmul.mubr.f32.gmra.mxu0 %v833
        %v928 = vpop.f32.mrf.mxu0
        %v929 = vadd.f32 0.0, %v928
        %v930 = vpop.f32.mrf.mxu0
        %931 = vmatprep.mubr.f32.mxu0 0.0
        %932 = vmatmul.mubr.f32.gmra.mxu0 %v836
        %v933 = vpop.f32.mrf.mxu0
        %v934 = vadd.f32 0.0, %v933
        %v935 = vpop.f32.mrf.mxu0
        %936 = vmatprep.mubr.f32.mxu0 0.0
        %937 = vmatmul.mubr.f32.gmra.mxu0 %v839
        %v938 = vpop.f32.mrf.mxu0
        %v939 = vadd.f32 0.0, %v938
        %v940 = vpop.f32.mrf.mxu0
        %941 = vmatprep.mubr.f32.mxu0 0.0
        %942 = vmatmul.mubr.f32.gmra.mxu0 %v842
        %v943 = vpop.f32.mrf.mxu0
        %v944 = vadd.f32 0.0, %v943
        %v945 = vpop.f32.mrf.mxu0
        %946 = vmatprep.mubr.f32.mxu0 0.0
        %947 = vmatmul.mubr.f32.gmra.mxu0 %v845
        %v948 = vpop.f32.mrf.mxu0
        %v949 = vadd.f32 0.0, %v948
        %v950 = vpop.f32.mrf.mxu0
        %951 = vdwg.mxu0
        %vm952 = vcmask 523264
        %v954 = vsel %vm952, %v275, 0
        %v957 = vsel %vm952, %v276, 0
        %v960 = vsel %vm952, %v277, 0
        %v963 = vsel %vm952, %v278, 0
        %v966 = vsel %vm952, %v279, 0
        %v969 = vsel %vm952, %v280, 0
        %v972 = vsel %vm952, %v281, 0
        %v975 = vsel %vm952, %v282, 0
        %977 = vmatprep.subr.mxu0 0.0
        %978 = vmatpush1.msra.mxu0 0.0
        %979 = vmatprep.subr.mxu0 0.0
        %980 = vmatpush1.msra.mxu0 0.0
        %981 = vmatprep.subr.mxu0 0.0
        %982 = vmatpush1.msra.mxu0 0.0
        %983 = vmatprep.subr.mxu0 0.0
        %984 = vmatpush1.msra.mxu0 0.0
        %985 = vmatprep.subr.mxu0 0.0
        %986 = vmatpush1.msra.mxu0 0.0
        %987 = vmatprep.subr.mxu0 0.0
        %988 = vmatpush1.msra.mxu0 0.0
        %989 = vmatprep.subr.mxu0 0.0
        %990 = vmatpush1.msra.mxu0 0.0
        %991 = vmatprep.subr.mxu0 0.0
        %992 = vmatpush1.msra.mxu0 0.0
        %993 = vmatprep.subr.mxu0 0.0
        %994 = vmatpush1.msra.mxu0 %v409
        %995 = vmatprep.subr.mxu0 0.0
        %996 = vmatpush1.msra.mxu0 %v404
        %997 = vmatprep.subr.mxu0 0.0
        %998 = vmatpush1.msra.mxu0 %v399
        %999 = vmatprep.subr.mxu0 0.0
        %1000 = vmatpush1.msra.mxu0 %v394
        %1001 = vmatprep.subr.mxu0 0.0
        %1002 = vmatpush1.msra.mxu0 %v389
        %1003 = vmatprep.subr.mxu0 0.0
        %1004 = vmatpush1.msra.mxu0 %v384
        %1005 = vmatprep.subr.mxu0 0.0
        %1006 = vmatpush1.msra.mxu0 %v379
        %1007 = vmatprep.subr.mxu0 0.0
        %1008 = vmatpush1.msra.mxu0 %v374
        %1009 = vmatprep.subr.mxu0 0.0
        %1010 = vmatpush2.msra.mxu0 0.0
        %1011 = vmatprep.subr.mxu0 0.0
        %1012 = vmatpush2.msra.mxu0 0.0
        %1013 = vmatprep.subr.mxu0 0.0
        %1014 = vmatpush2.msra.mxu0 0.0
        %1015 = vmatprep.subr.mxu0 0.0
        %1016 = vmatpush2.msra.mxu0 0.0
        %1017 = vmatprep.subr.mxu0 0.0
        %1018 = vmatpush2.msra.mxu0 0.0
        %1019 = vmatprep.subr.mxu0 0.0
        %1020 = vmatpush2.msra.mxu0 0.0
        %1021 = vmatprep.subr.mxu0 0.0
        %1022 = vmatpush2.msra.mxu0 0.0
        %1023 = vmatprep.subr.mxu0 0.0
        %1024 = vmatpush2.msra.mxu0 0.0
        %1025 = vmatprep.subr.mxu0 0.0
        %1026 = vmatpush2.msra.mxu0 0.0
        %1027 = vmatprep.subr.mxu0 0.0
        %1028 = vmatpush2.msra.mxu0 0.0
        %1029 = vmatprep.subr.mxu0 0.0
        %1030 = vmatpush2.msra.mxu0 0.0
        %1031 = vmatprep.subr.mxu0 0.0
        %1032 = vmatpush2.msra.mxu0 0.0
        %1033 = vmatprep.subr.mxu0 0.0
        %1034 = vmatpush2.msra.mxu0 0.0
        %1035 = vmatprep.subr.mxu0 0.0
        %1036 = vmatpush2.msra.mxu0 0.0
        %1037 = vmatprep.subr.mxu0 0.0
        %1038 = vmatpush2.msra.mxu0 0.0
        %1039 = vmatprep.subr.mxu0 0.0
        %1040 = vmatpush2.msra.mxu0 0.0
        %1041 = vmatprep.mubr.f32.mxu0 0.0
        %1042 = vmatmul.mubr.f32.gmra.mxu0 %v954
        %v1043 = vpop.f32.mrf.mxu0
        %v1044 = vadd.f32 0.0, %v1043
        %v1045 = vpop.f32.mrf.mxu0
        %1046 = vmatprep.mubr.f32.mxu0 0.0
        %1047 = vmatmul.mubr.f32.gmra.mxu0 %v957
        %v1048 = vpop.f32.mrf.mxu0
        %v1049 = vadd.f32 0.0, %v1048
        %v1050 = vpop.f32.mrf.mxu0
        %1051 = vmatprep.mubr.f32.mxu0 0.0
        %1052 = vmatmul.mubr.f32.gmra.mxu0 %v960
        %v1053 = vpop.f32.mrf.mxu0
        %v1054 = vadd.f32 0.0, %v1053
        %v1055 = vpop.f32.mrf.mxu0
        %1056 = vmatprep.mubr.f32.mxu0 0.0
        %1057 = vmatmul.mubr.f32.gmra.mxu0 %v963
        %v1058 = vpop.f32.mrf.mxu0
        %v1059 = vadd.f32 0.0, %v1058
        %v1060 = vpop.f32.mrf.mxu0
        %1061 = vmatprep.mubr.f32.mxu0 0.0
        %1062 = vmatmul.mubr.f32.gmra.mxu0 %v966
        %v1063 = vpop.f32.mrf.mxu0
        %v1064 = vadd.f32 0.0, %v1063
        %v1065 = vpop.f32.mrf.mxu0
        %1066 = vmatprep.mubr.f32.mxu0 0.0
        %1067 = vmatmul.mubr.f32.gmra.mxu0 %v969
        %v1068 = vpop.f32.mrf.mxu0
        %v1069 = vadd.f32 0.0, %v1068
        %v1070 = vpop.f32.mrf.mxu0
        %1071 = vmatprep.mubr.f32.mxu0 0.0
        %1072 = vmatmul.mubr.f32.gmra.mxu0 %v972
        %v1073 = vpop.f32.mrf.mxu0
        %v1074 = vadd.f32 0.0, %v1073
        %v1075 = vpop.f32.mrf.mxu0
        %1076 = vmatprep.mubr.f32.mxu0 0.0
        %1077 = vmatmul.mubr.f32.gmra.mxu0 %v975
        %v1078 = vpop.f32.mrf.mxu0
        %v1079 = vadd.f32 0.0, %v1078
        %v1080 = vpop.f32.mrf.mxu0
        %1081 = vdwg.mxu0
        %1082 = vmatprep.subr.mxu0 0.0
        %1083 = vmatpush1.msra.mxu0 0.0
        %1084 = vmatprep.subr.mxu0 0.0
        %1085 = vmatpush1.msra.mxu0 0.0
        %1086 = vmatprep.subr.mxu0 0.0
        %1087 = vmatpush1.msra.mxu0 0.0
        %1088 = vmatprep.subr.mxu0 0.0
        %1089 = vmatpush1.msra.mxu0 0.0
        %1090 = vmatprep.subr.mxu0 0.0
        %1091 = vmatpush1.msra.mxu0 0.0
        %1092 = vmatprep.subr.mxu0 0.0
        %1093 = vmatpush1.msra.mxu0 0.0
        %1094 = vmatprep.subr.mxu0 0.0
        %1095 = vmatpush1.msra.mxu0 0.0
        %1096 = vmatprep.subr.mxu0 0.0
        %1097 = vmatpush1.msra.mxu0 0.0
        %1098 = vmatprep.subr.mxu0 0.0
        %1099 = vmatpush1.msra.mxu0 %v538
        %1100 = vmatprep.subr.mxu0 0.0
        %1101 = vmatpush1.msra.mxu0 %v533
        %1102 = vmatprep.subr.mxu0 0.0
        %1103 = vmatpush1.msra.mxu0 %v528
        %1104 = vmatprep.subr.mxu0 0.0
        %1105 = vmatpush1.msra.mxu0 %v523
        %1106 = vmatprep.subr.mxu0 0.0
        %1107 = vmatpush1.msra.mxu0 %v518
        %1108 = vmatprep.subr.mxu0 0.0
        %1109 = vmatpush1.msra.mxu0 %v513
        %1110 = vmatprep.subr.mxu0 0.0
        %1111 = vmatpush1.msra.mxu0 %v508
        %1112 = vmatprep.subr.mxu0 0.0
        %1113 = vmatpush1.msra.mxu0 %v503
        %1114 = vmatprep.subr.mxu0 0.0
        %1115 = vmatpush2.msra.mxu0 0.0
        %1116 = vmatprep.subr.mxu0 0.0
        %1117 = vmatpush2.msra.mxu0 0.0
        %1118 = vmatprep.subr.mxu0 0.0
        %1119 = vmatpush2.msra.mxu0 0.0
        %1120 = vmatprep.subr.mxu0 0.0
        %1121 = vmatpush2.msra.mxu0 0.0
        %1122 = vmatprep.subr.mxu0 0.0
        %1123 = vmatpush2.msra.mxu0 0.0
        %1124 = vmatprep.subr.mxu0 0.0
        %1125 = vmatpush2.msra.mxu0 0.0
        %1126 = vmatprep.subr.mxu0 0.0
        %1127 = vmatpush2.msra.mxu0 0.0
        %1128 = vmatprep.subr.mxu0 0.0
        %1129 = vmatpush2.msra.mxu0 0.0
        %1130 = vmatprep.subr.mxu0 0.0
        %1131 = vmatpush2.msra.mxu0 0.0
        %1132 = vmatprep.subr.mxu0 0.0
        %1133 = vmatpush2.msra.mxu0 0.0
        %1134 = vmatprep.subr.mxu0 0.0
        %1135 = vmatpush2.msra.mxu0 0.0
        %1136 = vmatprep.subr.mxu0 0.0
        %1137 = vmatpush2.msra.mxu0 0.0
        %1138 = vmatprep.subr.mxu0 0.0
        %1139 = vmatpush2.msra.mxu0 0.0
        %1140 = vmatprep.subr.mxu0 0.0
        %1141 = vmatpush2.msra.mxu0 0.0
        %1142 = vmatprep.subr.mxu0 0.0
        %1143 = vmatpush2.msra.mxu0 0.0
        %1144 = vmatprep.subr.mxu0 0.0
        %1145 = vmatpush2.msra.mxu0 0.0
        %1146 = vmatprep.mubr.f32.mxu0 0.0
        %1147 = vmatmul.mubr.f32.gmra.mxu0 %v954
        %v1148 = vpop.f32.mrf.mxu0
        %v1149 = vadd.f32 0.0, %v1148
        %v1150 = vpop.f32.mrf.mxu0
        %1151 = vmatprep.mubr.f32.mxu0 0.0
        %1152 = vmatmul.mubr.f32.gmra.mxu0 %v957
        %v1153 = vpop.f32.mrf.mxu0
        %v1154 = vadd.f32 0.0, %v1153
        %v1155 = vpop.f32.mrf.mxu0
        %1156 = vmatprep.mubr.f32.mxu0 0.0
        %1157 = vmatmul.mubr.f32.gmra.mxu0 %v960
        %v1158 = vpop.f32.mrf.mxu0
        %v1159 = vadd.f32 0.0, %v1158
        %v1160 = vpop.f32.mrf.mxu0
        %1161 = vmatprep.mubr.f32.mxu0 0.0
        %1162 = vmatmul.mubr.f32.gmra.mxu0 %v963
        %v1163 = vpop.f32.mrf.mxu0
        %v1164 = vadd.f32 0.0, %v1163
        %v1165 = vpop.f32.mrf.mxu0
        %1166 = vmatprep.mubr.f32.mxu0 0.0
        %1167 = vmatmul.mubr.f32.gmra.mxu0 %v966
        %v1168 = vpop.f32.mrf.mxu0
        %v1169 = vadd.f32 0.0, %v1168
        %v1170 = vpop.f32.mrf.mxu0
        %1171 = vmatprep.mubr.f32.mxu0 0.0
        %1172 = vmatmul.mubr.f32.gmra.mxu0 %v969
        %v1173 = vpop.f32.mrf.mxu0
        %v1174 = vadd.f32 0.0, %v1173
        %v1175 = vpop.f32.mrf.mxu0
        %1176 = vmatprep.mubr.f32.mxu0 0.0
        %1177 = vmatmul.mubr.f32.gmra.mxu0 %v972
        %v1178 = vpop.f32.mrf.mxu0
        %v1179 = vadd.f32 0.0, %v1178
        %v1180 = vpop.f32.mrf.mxu0
        %1181 = vmatprep.mubr.f32.mxu0 0.0
        %1182 = vmatmul.mubr.f32.gmra.mxu0 %v975
        %v1183 = vpop.f32.mrf.mxu0
        %v1184 = vadd.f32 0.0, %v1183
        %v1185 = vpop.f32.mrf.mxu0
        %1186 = vdwg.mxu0
        %1187 = vmatprep.subr.mxu0 0.0
        %1188 = vmatpush1.msra.mxu0 0.0
        %1189 = vmatprep.subr.mxu0 0.0
        %1190 = vmatpush1.msra.mxu0 0.0
        %1191 = vmatprep.subr.mxu0 0.0
        %1192 = vmatpush1.msra.mxu0 0.0
        %1193 = vmatprep.subr.mxu0 0.0
        %1194 = vmatpush1.msra.mxu0 0.0
        %1195 = vmatprep.subr.mxu0 0.0
        %1196 = vmatpush1.msra.mxu0 0.0
        %1197 = vmatprep.subr.mxu0 0.0
        %1198 = vmatpush1.msra.mxu0 0.0
        %1199 = vmatprep.subr.mxu0 0.0
        %1200 = vmatpush1.msra.mxu0 0.0
        %1201 = vmatprep.subr.mxu0 0.0
        %1202 = vmatpush1.msra.mxu0 0.0
        %1203 = vmatprep.subr.mxu0 0.0
        %1204 = vmatpush1.msra.mxu0 %v675
        %1205 = vmatprep.subr.mxu0 0.0
        %1206 = vmatpush1.msra.mxu0 %v670
        %1207 = vmatprep.subr.mxu0 0.0
        %1208 = vmatpush1.msra.mxu0 %v665
        %1209 = vmatprep.subr.mxu0 0.0
        %1210 = vmatpush1.msra.mxu0 %v660
        %1211 = vmatprep.subr.mxu0 0.0
        %1212 = vmatpush1.msra.mxu0 %v655
        %1213 = vmatprep.subr.mxu0 0.0
        %1214 = vmatpush1.msra.mxu0 %v650
        %1215 = vmatprep.subr.mxu0 0.0
        %1216 = vmatpush1.msra.mxu0 %v645
        %1217 = vmatprep.subr.mxu0 0.0
        %1218 = vmatpush1.msra.mxu0 %v640
        %1219 = vmatprep.subr.mxu0 0.0
        %1220 = vmatpush2.msra.mxu0 0.0
        %1221 = vmatprep.subr.mxu0 0.0
        %1222 = vmatpush2.msra.mxu0 0.0
        %1223 = vmatprep.subr.mxu0 0.0
        %1224 = vmatpush2.msra.mxu0 0.0
        %1225 = vmatprep.subr.mxu0 0.0
        %1226 = vmatpush2.msra.mxu0 0.0
        %1227 = vmatprep.subr.mxu0 0.0
        %1228 = vmatpush2.msra.mxu0 0.0
        %1229 = vmatprep.subr.mxu0 0.0
        %1230 = vmatpush2.msra.mxu0 0.0
        %1231 = vmatprep.subr.mxu0 0.0
        %1232 = vmatpush2.msra.mxu0 0.0
        %1233 = vmatprep.subr.mxu0 0.0
        %1234 = vmatpush2.msra.mxu0 0.0
        %1235 = vmatprep.subr.mxu0 0.0
        %1236 = vmatpush2.msra.mxu0 0.0
        %1237 = vmatprep.subr.mxu0 0.0
        %1238 = vmatpush2.msra.mxu0 0.0
        %1239 = vmatprep.subr.mxu0 0.0
        %1240 = vmatpush2.msra.mxu0 0.0
        %1241 = vmatprep.subr.mxu0 0.0
        %1242 = vmatpush2.msra.mxu0 0.0
        %1243 = vmatprep.subr.mxu0 0.0
        %1244 = vmatpush2.msra.mxu0 0.0
        %1245 = vmatprep.subr.mxu0 0.0
        %1246 = vmatpush2.msra.mxu0 0.0
        %1247 = vmatprep.subr.mxu0 0.0
        %1248 = vmatpush2.msra.mxu0 0.0
        %1249 = vmatprep.subr.mxu0 0.0
        %1250 = vmatpush2.msra.mxu0 0.0
        %1251 = vmatprep.mubr.f32.mxu0 0.0
        %1252 = vmatmul.mubr.f32.gmra.mxu0 %v954
        %v1253 = vpop.f32.mrf.mxu0
        %v1254 = vadd.f32 0.0, %v1253
        %v1255 = vpop.f32.mrf.mxu0
        %1256 = vmatprep.mubr.f32.mxu0 0.0
        %1257 = vmatmul.mubr.f32.gmra.mxu0 %v957
        %v1258 = vpop.f32.mrf.mxu0
        %v1259 = vadd.f32 0.0, %v1258
        %v1260 = vpop.f32.mrf.mxu0
        %1261 = vmatprep.mubr.f32.mxu0 0.0
        %1262 = vmatmul.mubr.f32.gmra.mxu0 %v960
        %v1263 = vpop.f32.mrf.mxu0
        %v1264 = vadd.f32 0.0, %v1263
        %v1265 = vpop.f32.mrf.mxu0
        %1266 = vmatprep.mubr.f32.mxu0 0.0
        %1267 = vmatmul.mubr.f32.gmra.mxu0 %v963
        %v1268 = vpop.f32.mrf.mxu0
        %v1269 = vadd.f32 0.0, %v1268
        %v1270 = vpop.f32.mrf.mxu0
        %1271 = vmatprep.mubr.f32.mxu0 0.0
        %1272 = vmatmul.mubr.f32.gmra.mxu0 %v966
        %v1273 = vpop.f32.mrf.mxu0
        %v1274 = vadd.f32 0.0, %v1273
        %v1275 = vpop.f32.mrf.mxu0
        %1276 = vmatprep.mubr.f32.mxu0 0.0
        %1277 = vmatmul.mubr.f32.gmra.mxu0 %v969
        %v1278 = vpop.f32.mrf.mxu0
        %v1279 = vadd.f32 0.0, %v1278
        %v1280 = vpop.f32.mrf.mxu0
        %1281 = vmatprep.mubr.f32.mxu0 0.0
        %1282 = vmatmul.mubr.f32.gmra.mxu0 %v972
        %v1283 = vpop.f32.mrf.mxu0
        %v1284 = vadd.f32 0.0, %v1283
        %v1285 = vpop.f32.mrf.mxu0
        %1286 = vmatprep.mubr.f32.mxu0 0.0
        %1287 = vmatmul.mubr.f32.gmra.mxu0 %v975
        %v1288 = vpop.f32.mrf.mxu0
        %v1289 = vadd.f32 0.0, %v1288
        %v1290 = vpop.f32.mrf.mxu0
        %1291 = vdwg.mxu0
        %1292 = vmatprep.subr.mxu0 0.0
        %1293 = vmatpush1.msra.mxu0 0.0
        %1294 = vmatprep.subr.mxu0 0.0
        %1295 = vmatpush1.msra.mxu0 0.0
        %1296 = vmatprep.subr.mxu0 0.0
        %1297 = vmatpush1.msra.mxu0 0.0
        %1298 = vmatprep.subr.mxu0 0.0
        %1299 = vmatpush1.msra.mxu0 0.0
        %1300 = vmatprep.subr.mxu0 0.0
        %1301 = vmatpush1.msra.mxu0 0.0
        %1302 = vmatprep.subr.mxu0 0.0
        %1303 = vmatpush1.msra.mxu0 0.0
        %1304 = vmatprep.subr.mxu0 0.0
        %1305 = vmatpush1.msra.mxu0 0.0
        %1306 = vmatprep.subr.mxu0 0.0
        %1307 = vmatpush1.msra.mxu0 0.0
        %1308 = vmatprep.subr.mxu0 0.0
        %1309 = vmatpush1.msra.mxu0 %v812
        %1310 = vmatprep.subr.mxu0 0.0
        %1311 = vmatpush1.msra.mxu0 %v807
        %1312 = vmatprep.subr.mxu0 0.0
        %1313 = vmatpush1.msra.mxu0 %v802
        %1314 = vmatprep.subr.mxu0 0.0
        %1315 = vmatpush1.msra.mxu0 %v797
        %1316 = vmatprep.subr.mxu0 0.0
        %1317 = vmatpush1.msra.mxu0 %v792
        %1318 = vmatprep.subr.mxu0 0.0
        %1319 = vmatpush1.msra.mxu0 %v787
        %1320 = vmatprep.subr.mxu0 0.0
        %1321 = vmatpush1.msra.mxu0 %v782
        %1322 = vmatprep.subr.mxu0 0.0
        %1323 = vmatpush1.msra.mxu0 %v777
        %1324 = vmatprep.subr.mxu0 0.0
        %1325 = vmatpush2.msra.mxu0 0.0
        %1326 = vmatprep.subr.mxu0 0.0
        %1327 = vmatpush2.msra.mxu0 0.0
        %1328 = vmatprep.subr.mxu0 0.0
        %1329 = vmatpush2.msra.mxu0 0.0
        %1330 = vmatprep.subr.mxu0 0.0
        %1331 = vmatpush2.msra.mxu0 0.0
        %1332 = vmatprep.subr.mxu0 0.0
        %1333 = vmatpush2.msra.mxu0 0.0
        %1334 = vmatprep.subr.mxu0 0.0
        %1335 = vmatpush2.msra.mxu0 0.0
        %1336 = vmatprep.subr.mxu0 0.0
        %1337 = vmatpush2.msra.mxu0 0.0
        %1338 = vmatprep.subr.mxu0 0.0
        %1339 = vmatpush2.msra.mxu0 0.0
        %1340 = vmatprep.subr.mxu0 0.0
        %1341 = vmatpush2.msra.mxu0 0.0
        %1342 = vmatprep.subr.mxu0 0.0
        %1343 = vmatpush2.msra.mxu0 0.0
        %1344 = vmatprep.subr.mxu0 0.0
        %1345 = vmatpush2.msra.mxu0 0.0
        %1346 = vmatprep.subr.mxu0 0.0
        %1347 = vmatpush2.msra.mxu0 0.0
        %1348 = vmatprep.subr.mxu0 0.0
        %1349 = vmatpush2.msra.mxu0 0.0
        %1350 = vmatprep.subr.mxu0 0.0
        %1351 = vmatpush2.msra.mxu0 0.0
        %1352 = vmatprep.subr.mxu0 0.0
        %1353 = vmatpush2.msra.mxu0 0.0
        %1354 = vmatprep.subr.mxu0 0.0
        %1355 = vmatpush2.msra.mxu0 0.0
        %1356 = vmatprep.mubr.f32.mxu0 0.0
        %1357 = vmatmul.mubr.f32.gmra.mxu0 %v954
        %v1358 = vpop.f32.mrf.mxu0
        %v1359 = vadd.f32 0.0, %v1358
        %v1360 = vpop.f32.mrf.mxu0
        %1361 = vmatprep.mubr.f32.mxu0 0.0
        %1362 = vmatmul.mubr.f32.gmra.mxu0 %v957
        %v1363 = vpop.f32.mrf.mxu0
        %v1364 = vadd.f32 0.0, %v1363
        %v1365 = vpop.f32.mrf.mxu0
        %1366 = vmatprep.mubr.f32.mxu0 0.0
        %1367 = vmatmul.mubr.f32.gmra.mxu0 %v960
        %v1368 = vpop.f32.mrf.mxu0
        %v1369 = vadd.f32 0.0, %v1368
        %v1370 = vpop.f32.mrf.mxu0
        %1371 = vmatprep.mubr.f32.mxu0 0.0
        %1372 = vmatmul.mubr.f32.gmra.mxu0 %v963
        %v1373 = vpop.f32.mrf.mxu0
        %v1374 = vadd.f32 0.0, %v1373
        %v1375 = vpop.f32.mrf.mxu0
        %1376 = vmatprep.mubr.f32.mxu0 0.0
        %1377 = vmatmul.mubr.f32.gmra.mxu0 %v966
        %v1378 = vpop.f32.mrf.mxu0
        %v1379 = vadd.f32 0.0, %v1378
        %v1380 = vpop.f32.mrf.mxu0
        %1381 = vmatprep.mubr.f32.mxu0 0.0
        %1382 = vmatmul.mubr.f32.gmra.mxu0 %v969
        %v1383 = vpop.f32.mrf.mxu0
        %v1384 = vadd.f32 0.0, %v1383
        %v1385 = vpop.f32.mrf.mxu0
        %1386 = vmatprep.mubr.f32.mxu0 0.0
        %1387 = vmatmul.mubr.f32.gmra.mxu0 %v972
        %v1388 = vpop.f32.mrf.mxu0
        %v1389 = vadd.f32 0.0, %v1388
        %v1390 = vpop.f32.mrf.mxu0
        %1391 = vmatprep.mubr.f32.mxu0 0.0
        %1392 = vmatmul.mubr.f32.gmra.mxu0 %v975
        %v1393 = vpop.f32.mrf.mxu0
        %v1394 = vadd.f32 0.0, %v1393
        %v1395 = vpop.f32.mrf.mxu0
        %1396 = vdwg.mxu0
        %1397 = vmatprep.subr.mxu0 0.0
        %1398 = vmatpush1.msra.mxu0 0.0
        %1399 = vmatprep.subr.mxu0 0.0
        %1400 = vmatpush1.msra.mxu0 0.0
        %1401 = vmatprep.subr.mxu0 0.0
        %1402 = vmatpush1.msra.mxu0 0.0
        %1403 = vmatprep.subr.mxu0 0.0
        %1404 = vmatpush1.msra.mxu0 0.0
        %1405 = vmatprep.subr.mxu0 0.0
        %1406 = vmatpush1.msra.mxu0 0.0
        %1407 = vmatprep.subr.mxu0 0.0
        %1408 = vmatpush1.msra.mxu0 0.0
        %1409 = vmatprep.subr.mxu0 0.0
        %1410 = vmatpush1.msra.mxu0 0.0
        %1411 = vmatprep.subr.mxu0 0.0
        %1412 = vmatpush1.msra.mxu0 0.0
        %1413 = vmatprep.subr.mxu0 0.0
        %1414 = vmatpush1.msra.mxu0 %v949
        %1415 = vmatprep.subr.mxu0 0.0
        %1416 = vmatpush1.msra.mxu0 %v944
        %1417 = vmatprep.subr.mxu0 0.0
        %1418 = vmatpush1.msra.mxu0 %v939
        %1419 = vmatprep.subr.mxu0 0.0
        %1420 = vmatpush1.msra.mxu0 %v934
        %1421 = vmatprep.subr.mxu0 0.0
        %1422 = vmatpush1.msra.mxu0 %v929
        %1423 = vmatprep.subr.mxu0 0.0
        %1424 = vmatpush1.msra.mxu0 %v924
        %1425 = vmatprep.subr.mxu0 0.0
        %1426 = vmatpush1.msra.mxu0 %v919
        %1427 = vmatprep.subr.mxu0 0.0
        %1428 = vmatpush1.msra.mxu0 %v914
        %1429 = vmatprep.subr.mxu0 0.0
        %1430 = vmatpush2.msra.mxu0 0.0
        %1431 = vmatprep.subr.mxu0 0.0
        %1432 = vmatpush2.msra.mxu0 0.0
        %1433 = vmatprep.subr.mxu0 0.0
        %1434 = vmatpush2.msra.mxu0 0.0
        %1435 = vmatprep.subr.mxu0 0.0
        %1436 = vmatpush2.msra.mxu0 0.0
        %1437 = vmatprep.subr.mxu0 0.0
        %1438 = vmatpush2.msra.mxu0 0.0
        %1439 = vmatprep.subr.mxu0 0.0
        %1440 = vmatpush2.msra.mxu0 0.0
        %1441 = vmatprep.subr.mxu0 0.0
        %1442 = vmatpush2.msra.mxu0 0.0
        %1443 = vmatprep.subr.mxu0 0.0
        %1444 = vmatpush2.msra.mxu0 0.0
        %1445 = vmatprep.subr.mxu0 0.0
        %1446 = vmatpush2.msra.mxu0 0.0
        %1447 = vmatprep.subr.mxu0 0.0
        %1448 = vmatpush2.msra.mxu0 0.0
        %1449 = vmatprep.subr.mxu0 0.0
        %1450 = vmatpush2.msra.mxu0 0.0
        %1451 = vmatprep.subr.mxu0 0.0
        %1452 = vmatpush2.msra.mxu0 0.0
        %1453 = vmatprep.subr.mxu0 0.0
        %1454 = vmatpush2.msra.mxu0 0.0
        %1455 = vmatprep.subr.mxu0 0.0
        %1456 = vmatpush2.msra.mxu0 0.0
        %1457 = vmatprep.subr.mxu0 0.0
        %1458 = vmatpush2.msra.mxu0 0.0
        %1459 = vmatprep.subr.mxu0 0.0
        %1460 = vmatpush2.msra.mxu0 0.0
        %1461 = vmatprep.mubr.f32.mxu0 0.0
        %1462 = vmatmul.mubr.f32.gmra.mxu0 %v954
        %v1463 = vpop.f32.mrf.mxu0
        %v1464 = vadd.f32 0.0, %v1463
        %v1465 = vpop.f32.mrf.mxu0
        %1466 = vmatprep.mubr.f32.mxu0 0.0
        %1467 = vmatmul.mubr.f32.gmra.mxu0 %v957
        %v1468 = vpop.f32.mrf.mxu0
        %v1469 = vadd.f32 0.0, %v1468
        %v1470 = vpop.f32.mrf.mxu0
        %1471 = vmatprep.mubr.f32.mxu0 0.0
        %1472 = vmatmul.mubr.f32.gmra.mxu0 %v960
        %v1473 = vpop.f32.mrf.mxu0
        %v1474 = vadd.f32 0.0, %v1473
        %v1475 = vpop.f32.mrf.mxu0
        %1476 = vmatprep.mubr.f32.mxu0 0.0
        %1477 = vmatmul.mubr.f32.gmra.mxu0 %v963
        %v1478 = vpop.f32.mrf.mxu0
        %v1479 = vadd.f32 0.0, %v1478
        %v1480 = vpop.f32.mrf.mxu0
        %1481 = vmatprep.mubr.f32.mxu0 0.0
        %1482 = vmatmul.mubr.f32.gmra.mxu0 %v966
        %v1483 = vpop.f32.mrf.mxu0
        %v1484 = vadd.f32 0.0, %v1483
        %v1485 = vpop.f32.mrf.mxu0
        %1486 = vmatprep.mubr.f32.mxu0 0.0
        %1487 = vmatmul.mubr.f32.gmra.mxu0 %v969
        %v1488 = vpop.f32.mrf.mxu0
        %v1489 = vadd.f32 0.0, %v1488
        %v1490 = vpop.f32.mrf.mxu0
        %1491 = vmatprep.mubr.f32.mxu0 0.0
        %1492 = vmatmul.mubr.f32.gmra.mxu0 %v972
        %v1493 = vpop.f32.mrf.mxu0
        %v1494 = vadd.f32 0.0, %v1493
        %v1495 = vpop.f32.mrf.mxu0
        %1496 = vmatprep.mubr.f32.mxu0 0.0
        %1497 = vmatmul.mubr.f32.gmra.mxu0 %v975
        %v1498 = vpop.f32.mrf.mxu0
        %v1499 = vadd.f32 0.0, %v1498
        %v1500 = vpop.f32.mrf.mxu0
        %1501 = vdwg.mxu0
        %v1502 = vmul.f32 %v1044, %v1044
        %v1503 = vmul.f32 %v1049, %v1049
        %v1504 = vmul.f32 %v1054, %v1054
        %v1505 = vmul.f32 %v1059, %v1059
        %v1506 = vmul.f32 %v1064, %v1064
        %v1507 = vmul.f32 %v1069, %v1069
        %v1508 = vmul.f32 %v1074, %v1074
        %v1509 = vmul.f32 %v1079, %v1079
        %v1510 = vmul.f32 %v1149, %v1149
        %v1511 = vmul.f32 %v1154, %v1154
        %v1512 = vmul.f32 %v1159, %v1159
        %v1513 = vmul.f32 %v1164, %v1164
        %v1514 = vmul.f32 %v1169, %v1169
        %v1515 = vmul.f32 %v1174, %v1174
        %v1516 = vmul.f32 %v1179, %v1179
        %v1517 = vmul.f32 %v1184, %v1184
        %v1518 = vmul.f32 %v1044, %v1149
        %v1519 = vmul.f32 %v1049, %v1154
        %v1520 = vmul.f32 %v1054, %v1159
        %v1521 = vmul.f32 %v1059, %v1164
        %v1522 = vmul.f32 %v1064, %v1169
        %v1523 = vmul.f32 %v1069, %v1174
        %v1524 = vmul.f32 %v1074, %v1179
        %v1525 = vmul.f32 %v1079, %v1184
        %v1526 = vsub.f32 %v1254, %v1502
        %v1527 = vsub.f32 %v1259, %v1503
        %v1528 = vsub.f32 %v1264, %v1504
        %v1529 = vsub.f32 %v1269, %v1505
        %v1530 = vsub.f32 %v1274, %v1506
        %v1531 = vsub.f32 %v1279, %v1507
        %v1532 = vsub.f32 %v1284, %v1508
        %v1533 = vsub.f32 %v1289, %v1509
        %v1534 = vsub.f32 %v1359, %v1510
        %v1535 = vsub.f32 %v1364, %v1511
        %v1536 = vsub.f32 %v1369, %v1512
        %v1537 = vsub.f32 %v1374, %v1513
        %v1538 = vsub.f32 %v1379, %v1514
        %v1539 = vsub.f32 %v1384, %v1515
        %v1540 = vsub.f32 %v1389, %v1516
        %v1541 = vsub.f32 %v1394, %v1517
        %v1542 = vsub.f32 %v1464, %v1518
        %v1543 = vsub.f32 %v1469, %v1519
        %v1544 = vsub.f32 %v1474, %v1520
        %v1545 = vsub.f32 %v1479, %v1521
        %v1546 = vsub.f32 %v1484, %v1522
        %v1547 = vsub.f32 %v1489, %v1523
        %v1548 = vsub.f32 %v1494, %v1524
        %v1549 = vsub.f32 %v1499, %v1525
        %v1550 = vmul.f32 %v1518, 2.0
        %v1551 = vmul.f32 %v1519, 2.0
        %v1552 = vmul.f32 %v1520, 2.0
        %v1553 = vmul.f32 %v1521, 2.0
        %v1554 = vmul.f32 %v1522, 2.0
        %v1555 = vmul.f32 %v1523, 2.0
        %v1556 = vmul.f32 %v1524, 2.0
        %v1557 = vmul.f32 %v1525, 2.0
        %v1558 = vadd.f32 %v1550, 0.0001
        %v1559 = vadd.f32 %v1551, 0.0001
        %v1560 = vadd.f32 %v1552, 0.0001
        %v1561 = vadd.f32 %v1553, 0.0001
        %v1562 = vadd.f32 %v1554, 0.0001
        %v1563 = vadd.f32 %v1555, 0.0001
        %v1564 = vadd.f32 %v1556, 0.0001
        %v1565 = vadd.f32 %v1557, 0.0001
        %v1566 = vmul.f32 %v1542, 2.0
        %v1567 = vmul.f32 %v1543, 2.0
        %v1568 = vmul.f32 %v1544, 2.0
        %v1569 = vmul.f32 %v1545, 2.0
        %v1570 = vmul.f32 %v1546, 2.0
        %v1571 = vmul.f32 %v1547, 2.0
        %v1572 = vmul.f32 %v1548, 2.0
        %v1573 = vmul.f32 %v1549, 2.0
        %v1574 = vadd.f32 %v1566, 0.0009
        %v1575 = vadd.f32 %v1567, 0.0009
        %v1576 = vadd.f32 %v1568, 0.0009
        %v1577 = vadd.f32 %v1569, 0.0009
        %v1578 = vadd.f32 %v1570, 0.0009
        %v1579 = vadd.f32 %v1571, 0.0009
        %v1580 = vadd.f32 %v1572, 0.0009
        %v1581 = vadd.f32 %v1573, 0.0009
        %v1582 = vmul.f32 %v1558, %v1574
        %v1583 = vmul.f32 %v1559, %v1575
        %v1584 = vmul.f32 %v1560, %v1576
        %v1585 = vmul.f32 %v1561, %v1577
        %v1586 = vmul.f32 %v1562, %v1578
        %v1587 = vmul.f32 %v1563, %v1579
        %v1588 = vmul.f32 %v1564, %v1580
        %v1589 = vmul.f32 %v1565, %v1581
        %v1590 = vadd.f32 %v1502, %v1510
        %v1591 = vadd.f32 %v1503, %v1511
        %v1592 = vadd.f32 %v1504, %v1512
        %v1593 = vadd.f32 %v1505, %v1513
        %v1594 = vadd.f32 %v1506, %v1514
        %v1595 = vadd.f32 %v1507, %v1515
        %v1596 = vadd.f32 %v1508, %v1516
        %v1597 = vadd.f32 %v1509, %v1517
        %v1598 = vadd.f32 %v1590, 0.0001
        %v1599 = vadd.f32 %v1591, 0.0001
        %v1600 = vadd.f32 %v1592, 0.0001
        %v1601 = vadd.f32 %v1593, 0.0001
        %v1602 = vadd.f32 %v1594, 0.0001
        %v1603 = vadd.f32 %v1595, 0.0001
        %v1604 = vadd.f32 %v1596, 0.0001
        %v1605 = vadd.f32 %v1597, 0.0001
        %v1606 = vadd.f32 %v1526, %v1534
        %v1607 = vadd.f32 %v1527, %v1535
        %v1608 = vadd.f32 %v1528, %v1536
        %v1609 = vadd.f32 %v1529, %v1537
        %v1610 = vadd.f32 %v1530, %v1538
        %v1611 = vadd.f32 %v1531, %v1539
        %v1612 = vadd.f32 %v1532, %v1540
        %v1613 = vadd.f32 %v1533, %v1541
        %v1614 = vadd.f32 %v1606, 0.0009
        %v1615 = vadd.f32 %v1607, 0.0009
        %v1616 = vadd.f32 %v1608, 0.0009
        %v1617 = vadd.f32 %v1609, 0.0009
        %v1618 = vadd.f32 %v1610, 0.0009
        %v1619 = vadd.f32 %v1611, 0.0009
        %v1620 = vadd.f32 %v1612, 0.0009
        %v1621 = vadd.f32 %v1613, 0.0009
        %v1622 = vmul.f32 %v1598, %v1614
        %v1623 = vmul.f32 %v1599, %v1615
        %v1624 = vmul.f32 %v1600, %v1616
        %v1625 = vmul.f32 %v1601, %v1617
        %v1626 = vmul.f32 %v1602, %v1618
        %v1627 = vmul.f32 %v1603, %v1619
        %v1628 = vmul.f32 %v1604, %v1620
        %v1629 = vmul.f32 %v1605, %v1621
        %v1630 = vrcp.pop %v1622
        %v1631 = vrcp.pop %v1623
        %v1632 = vrcp.pop %v1624
        %v1633 = vrcp.pop %v1625
        %v1634 = vrcp.pop %v1626
        %v1635 = vrcp.pop %v1627
        %v1636 = vrcp.pop %v1628
        %v1637 = vrcp.pop %v1629
        %v1638 = vmul.f32 %v1622, %v1630
        %v1639 = vmul.f32 %v1623, %v1631
        %v1640 = vmul.f32 %v1624, %v1632
        %v1641 = vmul.f32 %v1625, %v1633
        %v1642 = vmul.f32 %v1626, %v1634
        %v1643 = vmul.f32 %v1627, %v1635
        %v1644 = vmul.f32 %v1628, %v1636
        %v1645 = vmul.f32 %v1629, %v1637
        %v1646 = vsub.f32 2.0, %v1638
        %v1647 = vsub.f32 2.0, %v1639
        %v1648 = vsub.f32 2.0, %v1640
        %v1649 = vsub.f32 2.0, %v1641
        %v1650 = vsub.f32 2.0, %v1642
        %v1651 = vsub.f32 2.0, %v1643
        %v1652 = vsub.f32 2.0, %v1644
        %v1653 = vsub.f32 2.0, %v1645
        %v1654 = vmul.f32 %v1630, %v1646
        %v1655 = vmul.f32 %v1631, %v1647
        %v1656 = vmul.f32 %v1632, %v1648
        %v1657 = vmul.f32 %v1633, %v1649
        %v1658 = vmul.f32 %v1634, %v1650
        %v1659 = vmul.f32 %v1635, %v1651
        %v1660 = vmul.f32 %v1636, %v1652
        %v1661 = vmul.f32 %v1637, %v1653
        %v1662 = vmul.f32 %v1582, %v1654
        %v1663 = vmul.f32 %v1583, %v1655
        %v1664 = vmul.f32 %v1584, %v1656
        %v1665 = vmul.f32 %v1585, %v1657
        %v1666 = vmul.f32 %v1586, %v1658
        %v1667 = vmul.f32 %v1587, %v1659
        %v1668 = vmul.f32 %v1588, %v1660
        %v1669 = vmul.f32 %v1589, %v1661
        %v1670 = vsub.f32 1.0, %v1662
        %v1671 = vsub.f32 1.0, %v1663
        %v1672 = vsub.f32 1.0, %v1664
        %v1673 = vsub.f32 1.0, %v1665
        %v1674 = vsub.f32 1.0, %v1666
        %v1675 = vsub.f32 1.0, %v1667
        %v1676 = vsub.f32 1.0, %v1668
        %v1677 = vsub.f32 1.0, %v1669
        %v1678 = vmul.f32 %v1670, 0.5
        %v1679 = vmul.f32 %v1671, 0.5
        %v1680 = vmul.f32 %v1672, 0.5
        %v1681 = vmul.f32 %v1673, 0.5
        %v1682 = vmul.f32 %v1674, 0.5
        %v1683 = vmul.f32 %v1675, 0.5
        %v1684 = vmul.f32 %v1676, 0.5
        %v1685 = vmul.f32 %v1677, 0.5
        %v1686 = vmax.f32 %v1678, 0.0
        %v1687 = vmax.f32 %v1679, 0.0
        %v1688 = vmax.f32 %v1680, 0.0
        %v1689 = vmax.f32 %v1681, 0.0
        %v1690 = vmax.f32 %v1682, 0.0
        %v1691 = vmax.f32 %v1683, 0.0
        %v1692 = vmax.f32 %v1684, 0.0
        %v1693 = vmax.f32 %v1685, 0.0
        %v1694 = vmin.f32 %v1686, 1.0
        %v1695 = vmin.f32 %v1687, 1.0
        %v1696 = vmin.f32 %v1688, 1.0
        %v1697 = vmin.f32 %v1689, 1.0
        %v1698 = vmin.f32 %v1690, 1.0
        %v1699 = vmin.f32 %v1691, 1.0
        %v1700 = vmin.f32 %v1692, 1.0
        %v1701 = vmin.f32 %v1693, 1.0
        %v1702 = vsel %vm248, %v1694, 0.0
        %v1703 = vsel %vm248, %v1695, 0.0
        %v1704 = vadd.f32 %v1702, %v1703
        %v1705 = vsel %vm248, %v1696, 0.0
        %v1706 = vadd.f32 %v1704, %v1705
        %v1707 = vsel %vm248, %v1697, 0.0
        %v1708 = vadd.f32 %v1706, %v1707
        %v1709 = vsel %vm248, %v1698, 0.0
        %v1710 = vadd.f32 %v1708, %v1709
        %v1711 = vsel %vm248, %v1699, 0.0
        %v1712 = vadd.f32 %v1710, %v1711
        %v1713 = vsel %vm248, %v1700, 0.0
        %v1714 = vadd.f32 %v1712, %v1713
        %v1715 = vsel %vm248, %v1701, 0.0
        %v1716 = vadd.f32 %v1714, %v1715
        %1717 = vadd.xlane.f32.xlu0 %v1716
        %v1718 = vpop.xlane.xlu0 %1717
        %v1719 = vrot.slane %v1718, 4
        %v1720 = vadd.f32 %v1718, %v1719
        %v1721 = vrot.slane %v1720, 2
        %v1722 = vadd.f32 %v1720, %v1721
        %v1723 = vrot.slane %v1722, 1
        %v1724 = vadd.f32 %v1722, %v1723
        %s1725 = vtos %v1724
        %v1726 = vlaneseq
        %v1727 = vshrl.u32 %v1726, 7
        %vm1728 = vcmp.eq.s32.totalorder %v1727, 0
        %v1729 = vstv %s272
        %v1730 = vstv %s1725
        %v1731 = vsel %vm1728, %v1729, %v1730
        %1732 = vst [vmem:[%s205] sm:$0x3] %v1731
        %s1733 = sand.u32 %s120, 1
        %s1734 = scalar_lea.sflag [#allocation3], %s1733
        %s1735 = sand.u32 %s120, 1
        %s1736 = smul.addr %s1735, 2
        %s1737 = scalar_lea.vmem [#allocation2], %s1736
        // Predicated region
        $region37: #{tpu_custom_call.1} parent=35 // pred_check
          %p1738 = pneg %p130
        $region38: #{tpu_custom_call.1} parent=35 // pred_check_branch
          %1740 = sbr.rel (%p1738) target = $region40
        $region39: #{tpu_custom_call.1} parent=35 // pred_region
          %s1742 = ssub.s32 32, 32
          %1743 = vsyncadd %s1734, %s1742
          %s1744 = smul.addr %s18, 32
          %s1745 = scalar_lea.hbm %s4, %s1744
          %s1747 = sshll.u32 %s1737, 4
          %s1748 = int_to_ptr.vmem [resolvable:$true] %s1747
          %1750 = dma.vmem_to_hbm [thread:$0]  %s1748, 32, %s1745, %s1734
        $region40: #{tpu_custom_call.1} parent=35 // pred_fallthru
          _
      $region36: #{tpu_custom_call.1} parent=5 // pred_fallthru
        _
      %p1751 = scmp.le.s32.totalorder 2, %s13
      // Predicated region
      $region41: #{tpu_custom_call.1} parent=5 // pred_check
        %p1752 = pneg %p1751
      $region42: #{tpu_custom_call.1} parent=5 // pred_check_branch
        %1754 = sbr.rel (%p1752) target = $region44
      $region43: #{tpu_custom_call.1} parent=5 // pred_region
        %s1755 = ssub.s32 %s13, 2
        // Predicated region
        $region45: #{tpu_custom_call.1} parent=43 // pred_check
          %p1756 = pneg %p136
        $region46: #{tpu_custom_call.1} parent=43 // pred_check_branch
          %1758 = sbr.rel (%p1756) target = $region48
        $region47: #{tpu_custom_call.1} parent=43 // pred_region
          %s1759 = sand.u32 %s121, 1
          %s1760 = scalar_lea.sflag [#allocation3], %s1759
          %s1761 = sand.u32 %s121, 1
          %s1762 = smul.addr %s1761, 2
          %s1763 = scalar_lea.vmem [#allocation2], %s1762
          %1764 = dma.done %s1760, 32
        $region48: #{tpu_custom_call.1} parent=43 // pred_fallthru
          _
      $region44: #{tpu_custom_call.1} parent=5 // pred_fallthru
        _
    $region6: #{tpu_custom_call.1} parent=1 // loop_footer
      %s17 = sadd.s32 1, %s13
    $region7: #{tpu_custom_call.1} parent=1 // loop_footer_branch
      %12 = sbr.rel target = $region3
    $region8: #{tpu_custom_call.1} parent=1 // loop_exit
      _
    %1765 = vsyncpa [#allocation3], 1
    %s1766 = scalar_lea.sflag [#allocation3], 1
    %1767 = vsyncpa %s1766, 1

</llo_original>
